<compile_context>
chip_gen: v5e
topology: v5e:2x2
jax: 0.10.0
libtpu: 0.0.40
codegen_flags: <defaults>
</compile_context>

<pallas_src>
import functools

import jax
import jax.numpy as jnp
from jax import lax
from jax.experimental import pallas as pl
from jax.experimental.pallas import tpu as pltpu

EPS = 1e-5  # torch.nn.LayerNorm default eps


def _gelu_exact(x):
    # matches torch.nn.GELU() default (erf-based, not tanh approximation)
    return 0.5 * x * (1.0 + jax.scipy.special.erf(x * 0.7071067811865476))


def _round_up(n, m):
    return ((n + m - 1) // m) * m


def _double2dcnn_kernel(bias_ref, x_ref, rt_ref, et_ref, rv_ref, ev_ref,
                        tnp_ref, vnp_ref, fnp_ref, o_ref, *,
                        mode, use_norm, r_per_group):
    f32 = jnp.float32
    hi = lax.Precision.HIGHEST
    bias_t = bias_ref[0]            # SMEM scalars (conv biases)
    bias_v = bias_ref[1]
    rt = rt_ref[...]                # (S*V, S)  time-conv reduce matrix (folds time_w)
    rv = rv_ref[...]                # (S*V, V)  variable-conv reduce matrix (folds var_w)
    et = et_ref[...]                # (S, S*V)  0/1 broadcast of per-seq values onto flat slab
    ev = ev_ref[...]                # (V, S*V)  0/1 broadcast of per-variable values

    def ln_lanes(y, g, b):
        # two-pass LayerNorm along the last (lane) axis, biased variance like torch
        mu = jnp.mean(y, axis=-1, keepdims=True)
        c = y - mu
        var = jnp.mean(c * c, axis=-1, keepdims=True)
        return c * lax.rsqrt(var + EPS) * g[None, :] + b[None, :]

    # Static unroll over the samples packed into the sublane group dimension.
    for r in range(r_per_group):
        x2 = x_ref[:, r, :]                                   # (TG, S*V) lane-dense, input dtype

        # ---- time_cnn: Conv2d(1,1,(enc_in,1)) == weighted reduce over enc_in (MXU) ----
        t = jnp.dot(x2, rt, preferred_element_type=f32, precision=hi) + bias_t   # (TG, S)
        if use_norm:                                          # LayerNorm([1,1,seq_len])
            t = ln_lanes(t, tnp_ref[0], tnp_ref[1])
        t = _gelu_exact(t)

        # ---- variable_cnn: Conv2d(1,1,(1,seq_len)) == weighted reduce over seq (MXU) ----
        v = jnp.dot(x2, rv, preferred_element_type=f32, precision=hi) + bias_v   # (TG, V)
        if use_norm:                                          # LayerNorm([1,enc_in,1])
            v = ln_lanes(v, vnp_ref[0], vnp_ref[1])
        v = _gelu_exact(v)

        # ---- broadcast the two rank-1 factors back onto the flat (S*V) lane axis ----
        t_full = jnp.dot(t, et, preferred_element_type=f32, precision=hi)        # (TG, S*V)
        v_full = jnp.dot(v, ev, preferred_element_type=f32, precision=hi)        # (TG, S*V)

        xf = x2.astype(f32)   # fused into the combine ops; no standalone VMEM copy
        if mode == 'res':
            comb = xf + t_full + v_full
        else:  # 'weight'
            comb = xf * (t_full * v_full)

        # ---- final LayerNorm([seq_len, enc_in]): per-sample over all S*V lanes ----
        if use_norm:
            comb = ln_lanes(comb, fnp_ref[0], fnp_ref[1])

        o_ref[:, r, :] = comb.astype(o_ref.dtype)             # unmasked lane-dense store


def double2dcnn_forward(x, params, *, mode, use_norm=True):
    """x: (B, seq_len, enc_in) -> (B, seq_len, enc_in); same semantics as the torch module."""
    assert mode in ('res', 'weight')
    B, S, V = x.shape
    SV = S * V
    f32 = jnp.float32

    # ---- pack samples into sublane groups: R = largest divisor of B <= 8 keeping >= 2 groups
    R = 1
    for d in range(2, 9):
        if B % d == 0 and (B // d) >= 2:
            R = d
    G = B // R
    xg = x.reshape(G, R, SV)                                   # contiguous => free, lane-dense

    # ---- constant operands (built once, resident in VMEM, fetched once by the pipeline) ----
    mat_dtype = x.dtype if x.dtype == jnp.bfloat16 else f32    # let the MXU eat bf16 directly
    time_w = params['time_w'].reshape(V).astype(f32)
    var_w = params['var_w'].reshape(S).astype(f32)
    rt = jnp.kron(jnp.eye(S, dtype=f32), time_w[:, None]).astype(mat_dtype)     # (SV, S)
    rv = jnp.kron(var_w[:, None], jnp.eye(V, dtype=f32)).astype(mat_dtype)      # (SV, V)
    et = jnp.kron(jnp.eye(S, dtype=f32), jnp.ones((1, V), f32))                 # (S, SV)
    ev = jnp.kron(jnp.ones((1, S), f32), jnp.eye(V, dtype=f32))                 # (V, SV)
    biases = jnp.concatenate([params['time_b'].reshape(1),
                              params['var_b'].reshape(1)]).astype(f32)          # (2,) -> SMEM
    tnp = jnp.stack([params['time_norm_w'].reshape(S),
                     params['time_norm_b'].reshape(S)]).astype(f32)             # (2, S)
    vnp = jnp.stack([params['var_norm_w'].reshape(V),
                     params['var_norm_b'].reshape(V)]).astype(f32)              # (2, V)
    fnp = jnp.stack([params['final_norm_w'].reshape(SV),
                     params['final_norm_b'].reshape(SV)]).astype(f32)           # (2, SV)

    # ---- padded-VMEM-aware tile choice (physical footprint, not logical bytes) ----
    lane_sv = _round_up(SV, 128)
    grp_bytes = _round_up(R, 8) * lane_sv * 4                  # one f32 group in VMEM, padded
    const_elems = (_round_up(SV, 8) * _round_up(S, 128) +      # rt
                   _round_up(S, 8) * lane_sv +                 # et
                   _round_up(SV, 8) * _round_up(V, 128) +      # rv
                   _round_up(V, 8) * lane_sv +                 # ev
                   _round_up(2, 8) * (_round_up(S, 128) + _round_up(V, 128) + lane_sv))
    const_bytes = const_elems * 4

    try:
        vmem_cap = int(pltpu.get_tpu_info().vmem_capacity_bytes)
    except Exception:  # noqa: BLE001 - older jax / CPU tracing; assume smallest (v7x) VMEM
        vmem_cap = 64 * 1024 * 1024
    budget = (vmem_cap * 3) // 4
    block_target = max(grp_bytes, vmem_cap // 16)              # ~4 MiB v7x, ~8 MiB v5e/v6e
    denom = 6 * grp_bytes                                      # 2 in + 2 out buffers + temps
    avail = max(budget - 2 * const_bytes - (4 << 20), denom)
    TG = max(1, min(avail // denom, block_target // grp_bytes, G))
    if G >= 2:
        TG = min(TG, (G + 1) // 2)                             # >= 2 grid steps (v7x megacore)
    num_blocks = pl.cdiv(G, TG)                                # TG need not divide G
    vmem_limit = int(min(max(6 * TG * grp_bytes + 2 * const_bytes + (4 << 20), 32 << 20),
                         budget))

    kernel = functools.partial(_double2dcnn_kernel, mode=mode, use_norm=use_norm,
                               r_per_group=R)

    out = pl.pallas_call(
        kernel,
        out_shape=jax.ShapeDtypeStruct((G, R, SV), x.dtype),
        grid=(num_blocks,),
        in_specs=[
            pl.BlockSpec(memory_space=pltpu.MemorySpace.SMEM),   # conv biases (2,)
            pl.BlockSpec((TG, R, SV), lambda i: (i, 0, 0)),      # activations (lane-dense)
            pl.BlockSpec((SV, S), lambda i: (0, 0)),             # rt
            pl.BlockSpec((S, SV), lambda i: (0, 0)),             # et
            pl.BlockSpec((SV, V), lambda i: (0, 0)),             # rv
            pl.BlockSpec((V, SV), lambda i: (0, 0)),             # ev
            pl.BlockSpec((2, S), lambda i: (0, 0)),              # time-norm gamma/beta
            pl.BlockSpec((2, V), lambda i: (0, 0)),              # variable-norm gamma/beta
            pl.BlockSpec((2, SV), lambda i: (0, 0)),             # final-norm gamma/beta (flat)
        ],
        out_specs=pl.BlockSpec((TG, R, SV), lambda i: (i, 0, 0)),
        compiler_params=pltpu.CompilerParams(
            dimension_semantics=("parallel",),                   # batch blocks are disjoint
            vmem_limit_bytes=vmem_limit,
        ),
    )(biases, xg, rt, et, rv, ev, tnp, vnp, fnp)

    return out.reshape(B, S, V)


# -------- pure-JAX reference (mirrors the torch forward; elementwise, no matmuls) --------
def reference_forward(x, p, *, mode, use_norm=True):
    B, S, V = x.shape

    def ln(y, g, b, axes):
        m = jnp.mean(y, axis=axes, keepdims=True)
        var = jnp.mean((y - m) ** 2, axis=axes, keepdims=True)
        return (y - m) / jnp.sqrt(var + EPS) * g + b

    t = jnp.sum(x * p['time_w'].reshape(1, 1, V), axis=2, keepdims=True) \
        + p['time_b'].reshape(1, 1, 1)                                    # (B, S, 1)
    if use_norm:
        t = ln(t, p['time_norm_w'].reshape(1, S, 1),
               p['time_norm_b'].reshape(1, S, 1), (1,))
    t = _gelu_exact(t)

    v = jnp.sum(x * p['var_w'].reshape(1, S, 1), axis=1, keepdims=True) \
        + p['var_b'].reshape(1, 1, 1)                                     # (B, 1, V)
    if use_norm:
        v = ln(v, p['var_norm_w'].reshape(1, 1, V),
               p['var_norm_b'].reshape(1, 1, V), (2,))
    v = _gelu_exact(v)

    out = x + t + v if mode == 'res' else x * (t * v)
    if use_norm:
        out = ln(out, p['final_norm_w'].reshape(1, S, V),
                 p['final_norm_b'].reshape(1, S, V), (1, 2))
    return out


if __name__ == "__main__":
    B, seq_len, enc_in = 2, 16, 8   # small shapes consistent with the module
    key = jax.random.PRNGKey(0)
    keys = jax.random.split(key, 11)

    params = {
        'time_w':       0.1 * jax.random.normal(keys[0], (enc_in,), jnp.float32),
        'time_b':       0.1 * jax.random.normal(keys[1], (1,), jnp.float32),
        'var_w':        0.1 * jax.random.normal(keys[2], (seq_len,), jnp.float32),
        'var_b':        0.1 * jax.random.normal(keys[3], (1,), jnp.float32),
        'time_norm_w':  1.0 + 0.1 * jax.random.normal(keys[4], (seq_len,), jnp.float32),
        'time_norm_b':  0.1 * jax.random.normal(keys[5], (seq_len,), jnp.float32),
        'var_norm_w':   1.0 + 0.1 * jax.random.normal(keys[6], (enc_in,), jnp.float32),
        'var_norm_b':   0.1 * jax.random.normal(keys[7], (enc_in,), jnp.float32),
        'final_norm_w': 1.0 + 0.1 * jax.random.normal(keys[8], (seq_len, enc_in), jnp.float32),
        'final_norm_b': 0.1 * jax.random.normal(keys[9], (seq_len, enc_in), jnp.float32),
    }
    x = jax.random.normal(keys[10], (B, seq_len, enc_in), jnp.float32)

    for mode in ('res', 'weight'):
        for use_norm in (True, False):
            out = double2dcnn_forward(x, params, mode=mode, use_norm=use_norm)
            out = jax.block_until_ready(out)
            ref = reference_forward(x, params, mode=mode, use_norm=use_norm)
            assert out.shape == (B, seq_len, enc_in)
            assert jnp.allclose(out, ref, atol=2e-3, rtol=2e-3), \
                f"mismatch in mode={mode} use_norm={use_norm}"

    print("KERNEL_OK")
</pallas_src>

<mosaic_0001>
module attributes {stable_mosaic.version = 11 : i64} {
  func.func @_double2dcnn_kernel(%arg0: i32, %arg1: memref<2xf32, #tpu.memory_space<smem>>, %arg2: memref<1x1x128xf32, #tpu.memory_space<vmem>>, %arg3: memref<128x16xf32, #tpu.memory_space<vmem>>, %arg4: memref<16x128xf32, #tpu.memory_space<vmem>>, %arg5: memref<128x8xf32, #tpu.memory_space<vmem>>, %arg6: memref<8x128xf32, #tpu.memory_space<vmem>>, %arg7: memref<2x16xf32, #tpu.memory_space<vmem>>, %arg8: memref<2x8xf32, #tpu.memory_space<vmem>>, %arg9: memref<2x128xf32, #tpu.memory_space<vmem>>, %arg10: memref<1x1x128xf32, #tpu.memory_space<vmem>>) attributes {dimension_semantics = [#tpu.dimension_semantics<parallel>], iteration_bounds = array<i64: 2>, scalar_prefetch = 0 : i64, scratch_operands = 0 : i64, tpu.core_type = #tpu.core_type<tc>, window_params = [{transform_indices = @transform_0, window_bounds = array<i64: 2>}, {transform_indices = @transform_1, window_bounds = array<i64: 1, 1, 128>}, {pipeline_mode = #tpu.pipeline_mode<synchronous>, transform_indices = @transform_2, window_bounds = array<i64: 128, 16>}, {pipeline_mode = #tpu.pipeline_mode<synchronous>, transform_indices = @transform_3, window_bounds = array<i64: 16, 128>}, {pipeline_mode = #tpu.pipeline_mode<synchronous>, transform_indices = @transform_4, window_bounds = array<i64: 128, 8>}, {pipeline_mode = #tpu.pipeline_mode<synchronous>, transform_indices = @transform_5, window_bounds = array<i64: 8, 128>}, {pipeline_mode = #tpu.pipeline_mode<synchronous>, transform_indices = @transform_6, window_bounds = array<i64: 2, 16>}, {pipeline_mode = #tpu.pipeline_mode<synchronous>, transform_indices = @transform_7, window_bounds = array<i64: 2, 8>}, {pipeline_mode = #tpu.pipeline_mode<synchronous>, transform_indices = @transform_8, window_bounds = array<i64: 2, 128>}, {transform_indices = @transform_9, window_bounds = array<i64: 1, 1, 128>}]} {
    %c0 = arith.constant 0 : index
    %0 = memref.load %arg1[%c0] : memref<2xf32, #tpu.memory_space<smem>>
    %c1 = arith.constant 1 : index
    %1 = memref.load %arg1[%c1] : memref<2xf32, #tpu.memory_space<smem>>
    %c0_0 = arith.constant 0 : index
    %c0_1 = arith.constant 0 : index
    %2 = vector.load %arg3[%c0_0, %c0_1] : memref<128x16xf32, #tpu.memory_space<vmem>>, vector<128x16xf32>
    %c0_2 = arith.constant 0 : index
    %c0_3 = arith.constant 0 : index
    %3 = vector.load %arg5[%c0_2, %c0_3] : memref<128x8xf32, #tpu.memory_space<vmem>>, vector<128x8xf32>
    %c0_4 = arith.constant 0 : index
    %c0_5 = arith.constant 0 : index
    %4 = vector.load %arg4[%c0_4, %c0_5] : memref<16x128xf32, #tpu.memory_space<vmem>>, vector<16x128xf32>
    %c0_6 = arith.constant 0 : index
    %c0_7 = arith.constant 0 : index
    %5 = vector.load %arg6[%c0_6, %c0_7] : memref<8x128xf32, #tpu.memory_space<vmem>>, vector<8x128xf32>
    %c0_8 = arith.constant 0 : index
    %c0_9 = arith.constant 0 : index
    %c0_10 = arith.constant 0 : index
    %6 = vector.load %arg2[%c0_8, %c0_9, %c0_10] : memref<1x1x128xf32, #tpu.memory_space<vmem>>, vector<1x1x128xf32>
    %7 = vector.shape_cast %6 : vector<1x1x128xf32> to vector<1x128xf32>
    %cst = arith.constant dense<0.000000e+00> : vector<1x16xf32>
    %8 = tpu.matmul %7, %2, %cst {dimension_numbers = #tpu.dot_dimension_numbers<[1], [0], [0], [1], [0, 0, 1, 1], [], []>, precision = #tpu.contract_precision<fp32>} : vector<1x128xf32>, vector<128x16xf32>, vector<1x16xf32> -> vector<1x16xf32>
    %9 = vector.broadcast %0 : f32 to vector<1x16xf32>
    %10 = arith.addf %8, %9 : vector<1x16xf32>
    %c0_11 = arith.constant 0 : index
    %c0_12 = arith.constant 0 : index
    %11 = vector.load %arg7[%c0_11, %c0_12] : memref<2x16xf32, #tpu.memory_space<vmem>>, vector<1x16xf32>
    %12 = vector.shape_cast %11 : vector<1x16xf32> to vector<16xf32>
    %c1_13 = arith.constant 1 : index
    %c0_14 = arith.constant 0 : index
    %13 = vector.load %arg7[%c1_13, %c0_14] : memref<2x16xf32, #tpu.memory_space<vmem>>, vector<1x16xf32>
    %14 = vector.shape_cast %13 : vector<1x16xf32> to vector<16xf32>
    %cst_15 = arith.constant dense<0.000000e+00> : vector<1xf32>
    %15 = vector.multi_reduction <add>, %10, %cst_15 [1] : vector<1x16xf32> to vector<1xf32>
    %16 = vector.shape_cast %15 : vector<1xf32> to vector<1x1xf32>
    %cst_16 = arith.constant 1.600000e+01 : f32
    %17 = vector.broadcast %cst_16 : f32 to vector<1x1xf32>
    %18 = arith.divf %16, %17 : vector<1x1xf32>
    %19 = vector.broadcast %18 : vector<1x1xf32> to vector<1x16xf32>
    %20 = arith.subf %10, %19 : vector<1x16xf32>
    %21 = arith.mulf %20, %20 : vector<1x16xf32>
    %cst_17 = arith.constant dense<0.000000e+00> : vector<1xf32>
    %22 = vector.multi_reduction <add>, %21, %cst_17 [1] : vector<1x16xf32> to vector<1xf32>
    %23 = vector.shape_cast %22 : vector<1xf32> to vector<1x1xf32>
    %cst_18 = arith.constant 1.600000e+01 : f32
    %24 = vector.broadcast %cst_18 : f32 to vector<1x1xf32>
    %25 = arith.divf %23, %24 : vector<1x1xf32>
    %cst_19 = arith.constant 9.99999974E-6 : f32
    %26 = vector.broadcast %cst_19 : f32 to vector<1x1xf32>
    %27 = arith.addf %25, %26 : vector<1x1xf32>
    %28 = math.rsqrt %27 : vector<1x1xf32>
    %29 = vector.broadcast %28 : vector<1x1xf32> to vector<1x16xf32>
    %30 = arith.mulf %20, %29 : vector<1x16xf32>
    %31 = vector.shape_cast %12 : vector<16xf32> to vector<1x16xf32>
    %32 = arith.mulf %30, %31 : vector<1x16xf32>
    %33 = vector.shape_cast %14 : vector<16xf32> to vector<1x16xf32>
    %34 = arith.addf %32, %33 : vector<1x16xf32>
    %cst_20 = arith.constant 5.000000e-01 : f32
    %35 = vector.broadcast %cst_20 : f32 to vector<1x16xf32>
    %36 = arith.mulf %35, %34 : vector<1x16xf32>
    %cst_21 = arith.constant 0.707106769 : f32
    %37 = vector.broadcast %cst_21 : f32 to vector<1x16xf32>
    %38 = arith.mulf %34, %37 : vector<1x16xf32>
    %39 = math.erf %38 : vector<1x16xf32>
    %cst_22 = arith.constant 1.000000e+00 : f32
    %40 = vector.broadcast %cst_22 : f32 to vector<1x16xf32>
    %41 = arith.addf %40, %39 : vector<1x16xf32>
    %42 = arith.mulf %36, %41 : vector<1x16xf32>
    %cst_23 = arith.constant dense<0.000000e+00> : vector<1x8xf32>
    %43 = tpu.matmul %7, %3, %cst_23 {dimension_numbers = #tpu.dot_dimension_numbers<[1], [0], [0], [1], [0, 0, 1, 1], [], []>, precision = #tpu.contract_precision<fp32>} : vector<1x128xf32>, vector<128x8xf32>, vector<1x8xf32> -> vector<1x8xf32>
    %44 = vector.broadcast %1 : f32 to vector<1x8xf32>
    %45 = arith.addf %43, %44 : vector<1x8xf32>
    %c0_24 = arith.constant 0 : index
    %c0_25 = arith.constant 0 : index
    %46 = vector.load %arg8[%c0_24, %c0_25] : memref<2x8xf32, #tpu.memory_space<vmem>>, vector<1x8xf32>
    %47 = vector.shape_cast %46 : vector<1x8xf32> to vector<8xf32>
    %c1_26 = arith.constant 1 : index
    %c0_27 = arith.constant 0 : index
    %48 = vector.load %arg8[%c1_26, %c0_27] : memref<2x8xf32, #tpu.memory_space<vmem>>, vector<1x8xf32>
    %49 = vector.shape_cast %48 : vector<1x8xf32> to vector<8xf32>
    %cst_28 = arith.constant dense<0.000000e+00> : vector<1xf32>
    %50 = vector.multi_reduction <add>, %45, %cst_28 [1] : vector<1x8xf32> to vector<1xf32>
    %51 = vector.shape_cast %50 : vector<1xf32> to vector<1x1xf32>
    %cst_29 = arith.constant 8.000000e+00 : f32
    %52 = vector.broadcast %cst_29 : f32 to vector<1x1xf32>
    %53 = arith.divf %51, %52 : vector<1x1xf32>
    %54 = vector.broadcast %53 : vector<1x1xf32> to vector<1x8xf32>
    %55 = arith.subf %45, %54 : vector<1x8xf32>
    %56 = arith.mulf %55, %55 : vector<1x8xf32>
    %cst_30 = arith.constant dense<0.000000e+00> : vector<1xf32>
    %57 = vector.multi_reduction <add>, %56, %cst_30 [1] : vector<1x8xf32> to vector<1xf32>
    %58 = vector.shape_cast %57 : vector<1xf32> to vector<1x1xf32>
    %cst_31 = arith.constant 8.000000e+00 : f32
    %59 = vector.broadcast %cst_31 : f32 to vector<1x1xf32>
    %60 = arith.divf %58, %59 : vector<1x1xf32>
    %cst_32 = arith.constant 9.99999974E-6 : f32
    %61 = vector.broadcast %cst_32 : f32 to vector<1x1xf32>
    %62 = arith.addf %60, %61 : vector<1x1xf32>
    %63 = math.rsqrt %62 : vector<1x1xf32>
    %64 = vector.broadcast %63 : vector<1x1xf32> to vector<1x8xf32>
    %65 = arith.mulf %55, %64 : vector<1x8xf32>
    %66 = vector.shape_cast %47 : vector<8xf32> to vector<1x8xf32>
    %67 = arith.mulf %65, %66 : vector<1x8xf32>
    %68 = vector.shape_cast %49 : vector<8xf32> to vector<1x8xf32>
    %69 = arith.addf %67, %68 : vector<1x8xf32>
    %cst_33 = arith.constant 5.000000e-01 : f32
    %70 = vector.broadcast %cst_33 : f32 to vector<1x8xf32>
    %71 = arith.mulf %70, %69 : vector<1x8xf32>
    %cst_34 = arith.constant 0.707106769 : f32
    %72 = vector.broadcast %cst_34 : f32 to vector<1x8xf32>
    %73 = arith.mulf %69, %72 : vector<1x8xf32>
    %74 = math.erf %73 : vector<1x8xf32>
    %cst_35 = arith.constant 1.000000e+00 : f32
    %75 = vector.broadcast %cst_35 : f32 to vector<1x8xf32>
    %76 = arith.addf %75, %74 : vector<1x8xf32>
    %77 = arith.mulf %71, %76 : vector<1x8xf32>
    %cst_36 = arith.constant dense<0.000000e+00> : vector<1x128xf32>
    %78 = tpu.matmul %42, %4, %cst_36 {dimension_numbers = #tpu.dot_dimension_numbers<[1], [0], [0], [1], [0, 0, 1, 1], [], []>, precision = #tpu.contract_precision<fp32>} : vector<1x16xf32>, vector<16x128xf32>, vector<1x128xf32> -> vector<1x128xf32>
    %cst_37 = arith.constant dense<0.000000e+00> : vector<1x128xf32>
    %79 = tpu.matmul %77, %5, %cst_37 {dimension_numbers = #tpu.dot_dimension_numbers<[1], [0], [0], [1], [0, 0, 1, 1], [], []>, precision = #tpu.contract_precision<fp32>} : vector<1x8xf32>, vector<8x128xf32>, vector<1x128xf32> -> vector<1x128xf32>
    %80 = arith.addf %7, %78 : vector<1x128xf32>
    %81 = arith.addf %80, %79 : vector<1x128xf32>
    %c0_38 = arith.constant 0 : index
    %c0_39 = arith.constant 0 : index
    %82 = vector.load %arg9[%c0_38, %c0_39] : memref<2x128xf32, #tpu.memory_space<vmem>>, vector<1x128xf32>
    %83 = vector.shape_cast %82 : vector<1x128xf32> to vector<128xf32>
    %c1_40 = arith.constant 1 : index
    %c0_41 = arith.constant 0 : index
    %84 = vector.load %arg9[%c1_40, %c0_41] : memref<2x128xf32, #tpu.memory_space<vmem>>, vector<1x128xf32>
    %85 = vector.shape_cast %84 : vector<1x128xf32> to vector<128xf32>
    %cst_42 = arith.constant dense<0.000000e+00> : vector<1xf32>
    %86 = vector.multi_reduction <add>, %81, %cst_42 [1] : vector<1x128xf32> to vector<1xf32>
    %87 = vector.shape_cast %86 : vector<1xf32> to vector<1x1xf32>
    %cst_43 = arith.constant 1.280000e+02 : f32
    %88 = vector.broadcast %cst_43 : f32 to vector<1x1xf32>
    %89 = arith.divf %87, %88 : vector<1x1xf32>
    %90 = vector.broadcast %89 : vector<1x1xf32> to vector<1x128xf32>
    %91 = arith.subf %81, %90 : vector<1x128xf32>
    %92 = arith.mulf %91, %91 : vector<1x128xf32>
    %cst_44 = arith.constant dense<0.000000e+00> : vector<1xf32>
    %93 = vector.multi_reduction <add>, %92, %cst_44 [1] : vector<1x128xf32> to vector<1xf32>
    %94 = vector.shape_cast %93 : vector<1xf32> to vector<1x1xf32>
    %cst_45 = arith.constant 1.280000e+02 : f32
    %95 = vector.broadcast %cst_45 : f32 to vector<1x1xf32>
    %96 = arith.divf %94, %95 : vector<1x1xf32>
    %cst_46 = arith.constant 9.99999974E-6 : f32
    %97 = vector.broadcast %cst_46 : f32 to vector<1x1xf32>
    %98 = arith.addf %96, %97 : vector<1x1xf32>
    %99 = math.rsqrt %98 : vector<1x1xf32>
    %100 = vector.broadcast %99 : vector<1x1xf32> to vector<1x128xf32>
    %101 = arith.mulf %91, %100 : vector<1x128xf32>
    %102 = vector.shape_cast %83 : vector<128xf32> to vector<1x128xf32>
    %103 = arith.mulf %101, %102 : vector<1x128xf32>
    %104 = vector.shape_cast %85 : vector<128xf32> to vector<1x128xf32>
    %105 = arith.addf %103, %104 : vector<1x128xf32>
    %c0_47 = arith.constant 0 : index
    %c0_48 = arith.constant 0 : index
    %c0_49 = arith.constant 0 : index
    %106 = vector.load %arg10[%c0_47, %c0_48, %c0_49] : memref<1x1x128xf32, #tpu.memory_space<vmem>>, vector<1x1x128xf32>
    %107 = vector.shape_cast %106 : vector<1x1x128xf32> to vector<1x128xf32>
    %108 = vector.shape_cast %105 : vector<1x128xf32> to vector<1x1x128xf32>
    tpu.vector_store %arg10[%c0_47, %c0_48, %c0_49], %108 {strides = array<i32>} : memref<1x1x128xf32, #tpu.memory_space<vmem>>, vector<1x1x128xf32>,
    return
  }
  func.func @transform_0(%arg0: i32) -> i32 {
    %c0_i32 = arith.constant 0 : i32
    %c0_i32_0 = arith.constant 0 : i32
    return %c0_i32 : i32
  }
  func.func @transform_1(%arg0: i32) -> (i32, i32, i32) {
    %c0_i32 = arith.constant 0 : i32
    %c0_i32_0 = arith.constant 0 : i32
    %c0_i32_1 = arith.constant 0 : i32
    return %arg0, %c0_i32, %c0_i32_0 : i32, i32, i32
  }
  func.func @transform_2(%arg0: i32) -> (i32, i32) {
    %c0_i32 = arith.constant 0 : i32
    %c0_i32_0 = arith.constant 0 : i32
    %c0_i32_1 = arith.constant 0 : i32
    return %c0_i32, %c0_i32_0 : i32, i32
  }
  func.func @transform_3(%arg0: i32) -> (i32, i32) {
    %c0_i32 = arith.constant 0 : i32
    %c0_i32_0 = arith.constant 0 : i32
    %c0_i32_1 = arith.constant 0 : i32
    return %c0_i32, %c0_i32_0 : i32, i32
  }
  func.func @transform_4(%arg0: i32) -> (i32, i32) {
    %c0_i32 = arith.constant 0 : i32
    %c0_i32_0 = arith.constant 0 : i32
    %c0_i32_1 = arith.constant 0 : i32
    return %c0_i32, %c0_i32_0 : i32, i32
  }
  func.func @transform_5(%arg0: i32) -> (i32, i32) {
    %c0_i32 = arith.constant 0 : i32
    %c0_i32_0 = arith.constant 0 : i32
    %c0_i32_1 = arith.constant 0 : i32
    return %c0_i32, %c0_i32_0 : i32, i32
  }
  func.func @transform_6(%arg0: i32) -> (i32, i32) {
    %c0_i32 = arith.constant 0 : i32
    %c0_i32_0 = arith.constant 0 : i32
    %c0_i32_1 = arith.constant 0 : i32
    return %c0_i32, %c0_i32_0 : i32, i32
  }
  func.func @transform_7(%arg0: i32) -> (i32, i32) {
    %c0_i32 = arith.constant 0 : i32
    %c0_i32_0 = arith.constant 0 : i32
    %c0_i32_1 = arith.constant 0 : i32
    return %c0_i32, %c0_i32_0 : i32, i32
  }
  func.func @transform_8(%arg0: i32) -> (i32, i32) {
    %c0_i32 = arith.constant 0 : i32
    %c0_i32_0 = arith.constant 0 : i32
    %c0_i32_1 = arith.constant 0 : i32
    return %c0_i32, %c0_i32_0 : i32, i32
  }
  func.func @transform_9(%arg0: i32) -> (i32, i32, i32) {
    %c0_i32 = arith.constant 0 : i32
    %c0_i32_0 = arith.constant 0 : i32
    %c0_i32_1 = arith.constant 0 : i32
    return %arg0, %c0_i32, %c0_i32_0 : i32, i32, i32
  }
}

</mosaic_0001>

<llo_original>
// kernel: tpu_custom_call.1
$region0: #{tpu_custom_call.1}
  #allocation0 [shape = 'u32[]', space=smem, size = 0x4, offset = 0x4, fixed_abs, tag = 'smem constant byte address 0x4 - core index']
  #allocation1 [shape = 'u32[72,128]{1,0:T(1,128)}', space=vmem, size = 0x9000, scoped, tag = 'internal scratch']
  %s0 = inlined_call_operand.vmem [shape: f32[2], index: 0, kind: input, shape index: {}]
  %s1 = inlined_call_operand.vmem [shape: f32[2,1,128], index: 1, kind: input, shape index: {}]
  %s2 = inlined_call_operand.vmem [shape: f32[128,16], index: 2, kind: input, shape index: {}]
  %s3 = inlined_call_operand.vmem [shape: f32[16,128], index: 3, kind: input, shape index: {}]
  %s4 = inlined_call_operand.vmem [shape: f32[128,8], index: 4, kind: input, shape index: {}]
  %s5 = inlined_call_operand.vmem [shape: f32[8,128], index: 5, kind: input, shape index: {}]
  %s6 = inlined_call_operand.vmem [shape: f32[2,16], index: 6, kind: input, shape index: {}]
  %s7 = inlined_call_operand.vmem [shape: f32[2,8], index: 7, kind: input, shape index: {}]
  %s8 = inlined_call_operand.vmem [shape: f32[2,128], index: 8, kind: input, shape index: {}]
  %s9 = inlined_call_operand.hbm [shape: f32[2,1,128], index: 9, kind: output, shape index: {}]
  %s10 = sld [smem:[#allocation0]]
  $region73: #{tpu_custom_call.1} parent=0
    _
  %s12 = ssub.s32 1, %s10
  %s13 = scalar_select 0, %s12, %s10
  $region1: #{tpu_custom_call.1} parent=0
    #allocation2 [shape = 'u8[512]{0}', space=smem, size = 0x200, scoped, tag = 'input window, operand 0, single buffered']
    #allocation3 [shape = 's32[2]{0}', space=sflag, size = 0x8, scoped, tag = 'scoped memory for tpu_custom_call.1']
    #allocation4 [shape = 's32[2]{0}', space=sflag, size = 0x8, scoped, tag = 'scoped memory for tpu_custom_call.1']
    #allocation5 [shape = 'u8[1024]{0}', space=vmem, size = 0x400, scoped, tag = 'output window, operand 0']
    %14 = vsyncpa [#allocation4], 0
    %15 = vsyncpa [#allocation3], 0
    %s16 = scalar_lea.sflag [#allocation3], 1
    %17 = vsyncpa %s16, 0
    loop: start=0, step=1, limit=4
    $region2: #{tpu_custom_call.1} parent=1 // loop_pre_header
      _
    $region3: #{tpu_custom_call.1} parent=1 // loop_header
      %s19 = sphi 0, %s23
      %p20 = scmp.ge.s32.totalorder %s19, 4
      %s27 = sphi 0, %s27
      %s29 = sphi 0, %s27
      %s30 = sphi 0, %s29
      %s44 = sphi 0, %s30
      %s50 = sphi 0, %s52
      %s53 = sphi 0, %s50
      %s54 = sphi 0, %s53
      %s70 = sphi 0, %s54
      %s74 = sphi 0, %s74
      %s76 = sphi 0, %s74
      %s77 = sphi 0, %s76
      %s91 = sphi 0, %s77
      %s95 = sphi 0, %s95
      %s97 = sphi 0, %s95
      %s98 = sphi 0, %s97
      %s112 = sphi 0, %s98
      %s116 = sphi 0, %s116
      %s118 = sphi 0, %s116
      %s119 = sphi 0, %s118
      %s133 = sphi 0, %s119
      %s137 = sphi 0, %s137
      %s139 = sphi 0, %s137
      %s140 = sphi 0, %s139
      %s154 = sphi 0, %s140
      %s158 = sphi 0, %s158
      %s160 = sphi 0, %s158
      %s161 = sphi 0, %s160
      %s175 = sphi 0, %s161
      %s179 = sphi 0, %s179
      %s181 = sphi 0, %s179
      %s182 = sphi 0, %s181
      %s196 = sphi 0, %s182
      %s200 = sphi 0, %s200
      %s202 = sphi 0, %s200
      %s203 = sphi 0, %s202
      %s217 = sphi 0, %s203
      %s223 = sphi 0, %s225
      %s226 = sphi 0, %s223
      %s227 = sphi 0, %s226
      %s243 = sphi 0, %s227
    $region4: #{tpu_custom_call.1} parent=1 // loop_header_branch
      %22 = sbr.rel (%p20) target = $region8
    $region5: #{tpu_custom_call.1} parent=1 // loop_body
      %s24 = ssub.s32 %s19, 1
      %s25 = ssub.s32 %s19, 2
      %s26 = sadd.s32 %s19, 1
      %s28 = sadd.s32 %s27, 1
      %p31 = scmp.eq.s32.totalorder %s19, 1
      %p32 = scmp.ne.s32.totalorder %s27, %s29
      %p33 = scmp.eq.s32.totalorder %s19, 0
      %p34 = por %p32, %p33
      %p35 = scmp.ne.s32.totalorder %s27, %s29
      %p36 = scmp.eq.s32.totalorder %s24, 1
      %p37 = por %p35, %p36
      %p38 = scmp.ne.s32.totalorder %s29, %s30
      %p39 = scmp.eq.s32.totalorder %s24, 0
      %p40 = por %p38, %p39
      %p41 = scmp.ne.s32.totalorder %s29, %s30
      %p42 = scmp.eq.s32.totalorder %s25, 1
      %p43 = por %p41, %p42
      %p45 = scmp.ne.s32.totalorder %s30, %s44
      %p46 = scmp.eq.s32.totalorder %s25, 0
      %p47 = por %p45, %p46
      %s48 = ssub.s32 %s19, %s26
      %p49 = scmp.eq.s32.totalorder %s48, 0
      %s51 = sadd.s32 %s50, 1
      %s52 = scalar_select %p49, %s50, %s51
      %p55 = pneg %p49
      %p56 = scmp.eq.s32.totalorder %s19, 1
      %p57 = por %p55, %p56
      %p58 = scmp.ne.s32.totalorder %s50, %s53
      %p59 = scmp.eq.s32.totalorder %s19, 0
      %p60 = por %p58, %p59
      %p61 = scmp.ne.s32.totalorder %s50, %s53
      %p62 = scmp.eq.s32.totalorder %s24, 1
      %p63 = por %p61, %p62
      %p64 = scmp.ne.s32.totalorder %s53, %s54
      %p65 = scmp.eq.s32.totalorder %s24, 0
      %p66 = por %p64, %p65
      %p67 = scmp.ne.s32.totalorder %s53, %s54
      %p68 = scmp.eq.s32.totalorder %s25, 1
      %p69 = por %p67, %p68
      %p71 = scmp.ne.s32.totalorder %s54, %s70
      %p72 = scmp.eq.s32.totalorder %s25, 0
      %p73 = por %p71, %p72
      %s75 = sadd.s32 %s74, 1
      %p78 = scmp.eq.s32.totalorder %s19, 1
      %p79 = scmp.ne.s32.totalorder %s74, %s76
      %p80 = scmp.eq.s32.totalorder %s19, 0
      %p81 = por %p79, %p80
      %p82 = scmp.ne.s32.totalorder %s74, %s76
      %p83 = scmp.eq.s32.totalorder %s24, 1
      %p84 = por %p82, %p83
      %p85 = scmp.ne.s32.totalorder %s76, %s77
      %p86 = scmp.eq.s32.totalorder %s24, 0
      %p87 = por %p85, %p86
      %p88 = scmp.ne.s32.totalorder %s76, %s77
      %p89 = scmp.eq.s32.totalorder %s25, 1
      %p90 = por %p88, %p89
      %p92 = scmp.ne.s32.totalorder %s77, %s91
      %p93 = scmp.eq.s32.totalorder %s25, 0
      %p94 = por %p92, %p93
      %s96 = sadd.s32 %s95, 1
      %p99 = scmp.eq.s32.totalorder %s19, 1
      %p100 = scmp.ne.s32.totalorder %s95, %s97
      %p101 = scmp.eq.s32.totalorder %s19, 0
      %p102 = por %p100, %p101
      %p103 = scmp.ne.s32.totalorder %s95, %s97
      %p104 = scmp.eq.s32.totalorder %s24, 1
      %p105 = por %p103, %p104
      %p106 = scmp.ne.s32.totalorder %s97, %s98
      %p107 = scmp.eq.s32.totalorder %s24, 0
      %p108 = por %p106, %p107
      %p109 = scmp.ne.s32.totalorder %s97, %s98
      %p110 = scmp.eq.s32.totalorder %s25, 1
      %p111 = por %p109, %p110
      %p113 = scmp.ne.s32.totalorder %s98, %s112
      %p114 = scmp.eq.s32.totalorder %s25, 0
      %p115 = por %p113, %p114
      %s117 = sadd.s32 %s116, 1
      %p120 = scmp.eq.s32.totalorder %s19, 1
      %p121 = scmp.ne.s32.totalorder %s116, %s118
      %p122 = scmp.eq.s32.totalorder %s19, 0
      %p123 = por %p121, %p122
      %p124 = scmp.ne.s32.totalorder %s116, %s118
      %p125 = scmp.eq.s32.totalorder %s24, 1
      %p126 = por %p124, %p125
      %p127 = scmp.ne.s32.totalorder %s118, %s119
      %p128 = scmp.eq.s32.totalorder %s24, 0
      %p129 = por %p127, %p128
      %p130 = scmp.ne.s32.totalorder %s118, %s119
      %p131 = scmp.eq.s32.totalorder %s25, 1
      %p132 = por %p130, %p131
      %p134 = scmp.ne.s32.totalorder %s119, %s133
      %p135 = scmp.eq.s32.totalorder %s25, 0
      %p136 = por %p134, %p135
      %s138 = sadd.s32 %s137, 1
      %p141 = scmp.eq.s32.totalorder %s19, 1
      %p142 = scmp.ne.s32.totalorder %s137, %s139
      %p143 = scmp.eq.s32.totalorder %s19, 0
      %p144 = por %p142, %p143
      %p145 = scmp.ne.s32.totalorder %s137, %s139
      %p146 = scmp.eq.s32.totalorder %s24, 1
      %p147 = por %p145, %p146
      %p148 = scmp.ne.s32.totalorder %s139, %s140
      %p149 = scmp.eq.s32.totalorder %s24, 0
      %p150 = por %p148, %p149
      %p151 = scmp.ne.s32.totalorder %s139, %s140
      %p152 = scmp.eq.s32.totalorder %s25, 1
      %p153 = por %p151, %p152
      %p155 = scmp.ne.s32.totalorder %s140, %s154
      %p156 = scmp.eq.s32.totalorder %s25, 0
      %p157 = por %p155, %p156
      %s159 = sadd.s32 %s158, 1
      %p162 = scmp.eq.s32.totalorder %s19, 1
      %p163 = scmp.ne.s32.totalorder %s158, %s160
      %p164 = scmp.eq.s32.totalorder %s19, 0
      %p165 = por %p163, %p164
      %p166 = scmp.ne.s32.totalorder %s158, %s160
      %p167 = scmp.eq.s32.totalorder %s24, 1
      %p168 = por %p166, %p167
      %p169 = scmp.ne.s32.totalorder %s160, %s161
      %p170 = scmp.eq.s32.totalorder %s24, 0
      %p171 = por %p169, %p170
      %p172 = scmp.ne.s32.totalorder %s160, %s161
      %p173 = scmp.eq.s32.totalorder %s25, 1
      %p174 = por %p172, %p173
      %p176 = scmp.ne.s32.totalorder %s161, %s175
      %p177 = scmp.eq.s32.totalorder %s25, 0
      %p178 = por %p176, %p177
      %s180 = sadd.s32 %s179, 1
      %p183 = scmp.eq.s32.totalorder %s19, 1
      %p184 = scmp.ne.s32.totalorder %s179, %s181
      %p185 = scmp.eq.s32.totalorder %s19, 0
      %p186 = por %p184, %p185
      %p187 = scmp.ne.s32.totalorder %s179, %s181
      %p188 = scmp.eq.s32.totalorder %s24, 1
      %p189 = por %p187, %p188
      %p190 = scmp.ne.s32.totalorder %s181, %s182
      %p191 = scmp.eq.s32.totalorder %s24, 0
      %p192 = por %p190, %p191
      %p193 = scmp.ne.s32.totalorder %s181, %s182
      %p194 = scmp.eq.s32.totalorder %s25, 1
      %p195 = por %p193, %p194
      %p197 = scmp.ne.s32.totalorder %s182, %s196
      %p198 = scmp.eq.s32.totalorder %s25, 0
      %p199 = por %p197, %p198
      %s201 = sadd.s32 %s200, 1
      %p204 = scmp.eq.s32.totalorder %s19, 1
      %p205 = scmp.ne.s32.totalorder %s200, %s202
      %p206 = scmp.eq.s32.totalorder %s19, 0
      %p207 = por %p205, %p206
      %p208 = scmp.ne.s32.totalorder %s200, %s202
      %p209 = scmp.eq.s32.totalorder %s24, 1
      %p210 = por %p208, %p209
      %p211 = scmp.ne.s32.totalorder %s202, %s203
      %p212 = scmp.eq.s32.totalorder %s24, 0
      %p213 = por %p211, %p212
      %p214 = scmp.ne.s32.totalorder %s202, %s203
      %p215 = scmp.eq.s32.totalorder %s25, 1
      %p216 = por %p214, %p215
      %p218 = scmp.ne.s32.totalorder %s203, %s217
      %p219 = scmp.eq.s32.totalorder %s25, 0
      %p220 = por %p218, %p219
      %s221 = ssub.s32 %s19, %s26
      %p222 = scmp.eq.s32.totalorder %s221, 0
      %s224 = sadd.s32 %s223, 1
      %s225 = scalar_select %p222, %s223, %s224
      %p228 = pneg %p222
      %p229 = scmp.eq.s32.totalorder %s19, 1
      %p230 = por %p228, %p229
      %p231 = scmp.ne.s32.totalorder %s223, %s226
      %p232 = scmp.eq.s32.totalorder %s19, 0
      %p233 = por %p231, %p232
      %p234 = scmp.ne.s32.totalorder %s223, %s226
      %p235 = scmp.eq.s32.totalorder %s24, 1
      %p236 = por %p234, %p235
      %p237 = scmp.ne.s32.totalorder %s226, %s227
      %p238 = scmp.eq.s32.totalorder %s24, 0
      %p239 = por %p237, %p238
      %p240 = scmp.ne.s32.totalorder %s226, %s227
      %p241 = scmp.eq.s32.totalorder %s25, 1
      %p242 = por %p240, %p241
      %p244 = scmp.ne.s32.totalorder %s227, %s243
      %p245 = scmp.eq.s32.totalorder %s25, 0
      %p246 = por %p244, %p245
      %p247 = scmp.le.s32.totalorder 1, %s19
      %p248 = scmp.lt.s32.totalorder %s19, 3
      %p249 = pnand %p247, %p248
      %p250 = pneg %p249
      // Predicated region
      $region9: #{tpu_custom_call.1} parent=5 // pred_check
        _
      $region10: #{tpu_custom_call.1} parent=5 // pred_check_branch
        %252 = sbr.rel (%p249) target = $region12
      $region11: #{tpu_custom_call.1} parent=5 // pred_region
        %s253 = ssub.s32 %s19, 1
        // Predicated region
        $region13: #{tpu_custom_call.1} parent=11 // pred_check
          %p254 = pneg %p40
        $region14: #{tpu_custom_call.1} parent=11 // pred_check_branch
          %256 = sbr.rel (%p254) target = $region16
        $region15: #{tpu_custom_call.1} parent=11 // pred_region
          %258 = vsyncadd [#allocation4], 0
          %s260 = sshll.u32 %s0, 4
          %s261 = int_to_ptr.vmem [resolvable:$true] %s260
          %263 = dma.vmem_to_smem %s261, 16, [#allocation2], [#allocation4]
        $region16: #{tpu_custom_call.1} parent=11 // pred_fallthru
          _
        // Predicated region
        $region17: #{tpu_custom_call.1} parent=11 // pred_check
          %p264 = pneg %p87
        $region18: #{tpu_custom_call.1} parent=11 // pred_check_branch
          %266 = sbr.rel (%p264) target = $region20
        $region19: #{tpu_custom_call.1} parent=11 // pred_region
          _
        $region20: #{tpu_custom_call.1} parent=11 // pred_fallthru
          _
        // Predicated region
        $region21: #{tpu_custom_call.1} parent=11 // pred_check
          %p267 = pneg %p108
        $region22: #{tpu_custom_call.1} parent=11 // pred_check_branch
          %269 = sbr.rel (%p267) target = $region24
        $region23: #{tpu_custom_call.1} parent=11 // pred_region
          _
        $region24: #{tpu_custom_call.1} parent=11 // pred_fallthru
          _
        // Predicated region
        $region25: #{tpu_custom_call.1} parent=11 // pred_check
          %p270 = pneg %p129
        $region26: #{tpu_custom_call.1} parent=11 // pred_check_branch
          %272 = sbr.rel (%p270) target = $region28
        $region27: #{tpu_custom_call.1} parent=11 // pred_region
          _
        $region28: #{tpu_custom_call.1} parent=11 // pred_fallthru
          _
        // Predicated region
        $region29: #{tpu_custom_call.1} parent=11 // pred_check
          %p273 = pneg %p150
        $region30: #{tpu_custom_call.1} parent=11 // pred_check_branch
          %275 = sbr.rel (%p273) target = $region32
        $region31: #{tpu_custom_call.1} parent=11 // pred_region
          _
        $region32: #{tpu_custom_call.1} parent=11 // pred_fallthru
          _
        // Predicated region
        $region33: #{tpu_custom_call.1} parent=11 // pred_check
          %p276 = pneg %p171
        $region34: #{tpu_custom_call.1} parent=11 // pred_check_branch
          %278 = sbr.rel (%p276) target = $region36
        $region35: #{tpu_custom_call.1} parent=11 // pred_region
          _
        $region36: #{tpu_custom_call.1} parent=11 // pred_fallthru
          _
        // Predicated region
        $region37: #{tpu_custom_call.1} parent=11 // pred_check
          %p279 = pneg %p192
        $region38: #{tpu_custom_call.1} parent=11 // pred_check_branch
          %281 = sbr.rel (%p279) target = $region40
        $region39: #{tpu_custom_call.1} parent=11 // pred_region
          _
        $region40: #{tpu_custom_call.1} parent=11 // pred_fallthru
          _
        // Predicated region
        $region41: #{tpu_custom_call.1} parent=11 // pred_check
          %p282 = pneg %p213
        $region42: #{tpu_custom_call.1} parent=11 // pred_check_branch
          %284 = sbr.rel (%p282) target = $region44
        $region43: #{tpu_custom_call.1} parent=11 // pred_region
          _
        $region44: #{tpu_custom_call.1} parent=11 // pred_fallthru
          _
      $region12: #{tpu_custom_call.1} parent=5 // pred_fallthru
        _
      %p285 = scmp.lt.s32.totalorder %s19, 2
      // Predicated region
      $region45: #{tpu_custom_call.1} parent=5 // pred_check
        %p286 = pneg %p285
      $region46: #{tpu_custom_call.1} parent=5 // pred_check_branch
        %288 = sbr.rel (%p286) target = $region48
      $region47: #{tpu_custom_call.1} parent=5 // pred_region
        // Predicated region
        $region49: #{tpu_custom_call.1} parent=47 // pred_check
          %p289 = pneg %p60
        $region50: #{tpu_custom_call.1} parent=47 // pred_check_branch
          %291 = sbr.rel (%p289) target = $region52
        $region51: #{tpu_custom_call.1} parent=47 // pred_region
          %p292 = scmp.lt.s32.totalorder %s19, 1
          %s293 = scalar_select %p292, %s19, 1
          %s294 = scalar_lea.vmem %s1, %s293
        $region52: #{tpu_custom_call.1} parent=47 // pred_fallthru
          _
      $region48: #{tpu_custom_call.1} parent=5 // pred_fallthru
        _
      %p295 = scmp.le.s32.totalorder 1, %s19
      %p296 = scmp.lt.s32.totalorder %s19, 3
      %p297 = pnand %p295, %p296
      %p298 = pneg %p297
      // Predicated region
      $region53: #{tpu_custom_call.1} parent=5 // pred_check
        _
      $region54: #{tpu_custom_call.1} parent=5 // pred_check_branch
        %300 = sbr.rel (%p297) target = $region56
      $region55: #{tpu_custom_call.1} parent=5 // pred_region
        %s301 = ssub.s32 %s19, 1
        // Predicated region
        $region57: #{tpu_custom_call.1} parent=55 // pred_check
          %p302 = pneg %p40
        $region58: #{tpu_custom_call.1} parent=55 // pred_check_branch
          %304 = sbr.rel (%p302) target = $region60
        $region59: #{tpu_custom_call.1} parent=55 // pred_region
          %306 = dma.done [#allocation4], 16
        $region60: #{tpu_custom_call.1} parent=55 // pred_fallthru
          _
        %307 = sfence
        %p308 = pneg %p40
        %p309 = pneg %p37
        %p310 = scmp.lt.s32.totalorder %s24, 1
        %s311 = scalar_select %p310, %s24, 1
        %s312 = scalar_lea.vmem %s1, %s311
        %p313 = pneg %p66
        %p314 = pneg %p63
        %p315 = pneg %p87
        %p316 = pneg %p84
        %p317 = pneg %p108
        %p318 = pneg %p105
        %p319 = pneg %p129
        %p320 = pneg %p126
        %p321 = pneg %p150
        %p322 = pneg %p147
        %p323 = pneg %p171
        %p324 = pneg %p168
        %p325 = pneg %p192
        %p326 = pneg %p189
        %p327 = pneg %p213
        %p328 = pneg %p210
        %p329 = pneg %p239
        %p330 = pneg %p236
        %s331 = sand.u32 %s226, 1
        %s332 = scalar_lea.sflag [#allocation3], %s331
        %s333 = sand.u32 %s226, 1
        %s334 = scalar_lea.vmem [#allocation5], %s333
        %p335 = scmp.lt.s32.totalorder %s24, 1
        %s336 = scalar_select %p335, %s24, 1
        %s337 = scalar_lea.vmem %s1, %s336
        %s338 = sld [smem:[#allocation2]]
        %s339 = sld [smem:[#allocation2 + $0x1]]
        %v340 = vld [vmem:[%s2] sm:$0xff]
        %v341 = vld [vmem:[%s2 + $0x8] sm:$0xff]
        %v342 = vld [vmem:[%s2 + $0x10] sm:$0xff]
        %v343 = vld [vmem:[%s2 + $0x18] sm:$0xff]
        %v344 = vld [vmem:[%s2 + $0x20] sm:$0xff]
        %v345 = vld [vmem:[%s2 + $0x28] sm:$0xff]
        %v346 = vld [vmem:[%s2 + $0x30] sm:$0xff]
        %v347 = vld [vmem:[%s2 + $0x38] sm:$0xff]
        %v348 = vld [vmem:[%s2 + $0x40] sm:$0xff]
        %v349 = vld [vmem:[%s2 + $0x48] sm:$0xff]
        %v350 = vld [vmem:[%s2 + $0x50] sm:$0xff]
        %v351 = vld [vmem:[%s2 + $0x58] sm:$0xff]
        %v352 = vld [vmem:[%s2 + $0x60] sm:$0xff]
        %v353 = vld [vmem:[%s2 + $0x68] sm:$0xff]
        %v354 = vld [vmem:[%s2 + $0x70] sm:$0xff]
        %v355 = vld [vmem:[%s2 + $0x78] sm:$0xff]
        %v356 = vld [vmem:[%s4] sm:$0xff]
        %v357 = vld [vmem:[%s4 + $0x8] sm:$0xff]
        %v358 = vld [vmem:[%s4 + $0x10] sm:$0xff]
        %v359 = vld [vmem:[%s4 + $0x18] sm:$0xff]
        %v360 = vld [vmem:[%s4 + $0x20] sm:$0xff]
        %v361 = vld [vmem:[%s4 + $0x28] sm:$0xff]
        %v362 = vld [vmem:[%s4 + $0x30] sm:$0xff]
        %v363 = vld [vmem:[%s4 + $0x38] sm:$0xff]
        %v364 = vld [vmem:[%s4 + $0x40] sm:$0xff]
        %v365 = vld [vmem:[%s4 + $0x48] sm:$0xff]
        %v366 = vld [vmem:[%s4 + $0x50] sm:$0xff]
        %v367 = vld [vmem:[%s4 + $0x58] sm:$0xff]
        %v368 = vld [vmem:[%s4 + $0x60] sm:$0xff]
        %v369 = vld [vmem:[%s4 + $0x68] sm:$0xff]
        %v370 = vld [vmem:[%s4 + $0x70] sm:$0xff]
        %v371 = vld [vmem:[%s4 + $0x78] sm:$0xff]
        %v372 = vld [vmem:[%s3] sm:$0xff]
        %v373 = vld [vmem:[%s3 + $0x8] sm:$0xff]
        %v374 = vld [vmem:[%s5] sm:$0xff]
        %v375 = vld [vmem:[%s337] sm:$0x1]
        %v376 = vstv %s338
        %v377 = vand.u32 %v355, 4294901760
        %378 = vmatpush.msra.mxu0 %v377
        %v379 = vand.u32 %v354, 4294901760
        %380 = vmatpush.msra.mxu0 %v379
        %v381 = vand.u32 %v353, 4294901760
        %382 = vmatpush.msra.mxu0 %v381
        %v383 = vand.u32 %v352, 4294901760
        %384 = vmatpush.msra.mxu0 %v383
        %v385 = vand.u32 %v351, 4294901760
        %386 = vmatpush.msra.mxu0 %v385
        %v387 = vand.u32 %v350, 4294901760
        %388 = vmatpush.msra.mxu0 %v387
        %v389 = vand.u32 %v349, 4294901760
        %390 = vmatpush.msra.mxu0 %v389
        %v391 = vand.u32 %v348, 4294901760
        %392 = vmatpush.msra.mxu0 %v391
        %v393 = vand.u32 %v347, 4294901760
        %394 = vmatpush.msra.mxu0 %v393
        %v395 = vand.u32 %v346, 4294901760
        %396 = vmatpush.msra.mxu0 %v395
        %v397 = vand.u32 %v345, 4294901760
        %398 = vmatpush.msra.mxu0 %v397
        %v399 = vand.u32 %v344, 4294901760
        %400 = vmatpush.msra.mxu0 %v399
        %v401 = vand.u32 %v343, 4294901760
        %402 = vmatpush.msra.mxu0 %v401
        %v403 = vand.u32 %v342, 4294901760
        %404 = vmatpush.msra.mxu0 %v403
        %v405 = vand.u32 %v341, 4294901760
        %406 = vmatpush.msra.mxu0 %v405
        %v407 = vand.u32 %v340, 4294901760
        %408 = vmatpush.msra.mxu0 %v407
        %v409 = vand.u32 %v375, 4294901760
        %v410 = vsub.f32 %v375, %v409
        %v411 = vand.u32 %v410, 4294901760
        %v412 = vsub.f32 %v410, %v411
        %v413 = vand.u32 %v412, 4294901760
        %414 = vmatmul.f32.gmra.mxu0 %v413
        %v415 = vpop.f32.mrf.mxu0
        %v416 = vadd.f32 %v376, %v415
        %417 = vdwg.mxu0
        %v418 = vand.u32 %v355, 4294901760
        %v419 = vsub.f32 %v355, %v418
        %v420 = vand.u32 %v419, 4294901760
        %v421 = vsub.f32 %v419, %v420
        %v422 = vand.u32 %v421, 4294901760
        %423 = vmatpush.msra.mxu0 %v422
        %v424 = vand.u32 %v354, 4294901760
        %v425 = vsub.f32 %v354, %v424
        %v426 = vand.u32 %v425, 4294901760
        %v427 = vsub.f32 %v425, %v426
        %v428 = vand.u32 %v427, 4294901760
        %429 = vmatpush.msra.mxu0 %v428
        %v430 = vand.u32 %v353, 4294901760
        %v431 = vsub.f32 %v353, %v430
        %v432 = vand.u32 %v431, 4294901760
        %v433 = vsub.f32 %v431, %v432
        %v434 = vand.u32 %v433, 4294901760
        %435 = vmatpush.msra.mxu0 %v434
        %v436 = vand.u32 %v352, 4294901760
        %v437 = vsub.f32 %v352, %v436
        %v438 = vand.u32 %v437, 4294901760
        %v439 = vsub.f32 %v437, %v438
        %v440 = vand.u32 %v439, 4294901760
        %441 = vmatpush.msra.mxu0 %v440
        %v442 = vand.u32 %v351, 4294901760
        %v443 = vsub.f32 %v351, %v442
        %v444 = vand.u32 %v443, 4294901760
        %v445 = vsub.f32 %v443, %v444
        %v446 = vand.u32 %v445, 4294901760
        %447 = vmatpush.msra.mxu0 %v446
        %v448 = vand.u32 %v350, 4294901760
        %v449 = vsub.f32 %v350, %v448
        %v450 = vand.u32 %v449, 4294901760
        %v451 = vsub.f32 %v449, %v450
        %v452 = vand.u32 %v451, 4294901760
        %453 = vmatpush.msra.mxu0 %v452
        %v454 = vand.u32 %v349, 4294901760
        %v455 = vsub.f32 %v349, %v454
        %v456 = vand.u32 %v455, 4294901760
        %v457 = vsub.f32 %v455, %v456
        %v458 = vand.u32 %v457, 4294901760
        %459 = vmatpush.msra.mxu0 %v458
        %v460 = vand.u32 %v348, 4294901760
        %v461 = vsub.f32 %v348, %v460
        %v462 = vand.u32 %v461, 4294901760
        %v463 = vsub.f32 %v461, %v462
        %v464 = vand.u32 %v463, 4294901760
        %465 = vmatpush.msra.mxu0 %v464
        %v466 = vand.u32 %v347, 4294901760
        %v467 = vsub.f32 %v347, %v466
        %v468 = vand.u32 %v467, 4294901760
        %v469 = vsub.f32 %v467, %v468
        %v470 = vand.u32 %v469, 4294901760
        %471 = vmatpush.msra.mxu0 %v470
        %v472 = vand.u32 %v346, 4294901760
        %v473 = vsub.f32 %v346, %v472
        %v474 = vand.u32 %v473, 4294901760
        %v475 = vsub.f32 %v473, %v474
        %v476 = vand.u32 %v475, 4294901760
        %477 = vmatpush.msra.mxu0 %v476
        %v478 = vand.u32 %v345, 4294901760
        %v479 = vsub.f32 %v345, %v478
        %v480 = vand.u32 %v479, 4294901760
        %v481 = vsub.f32 %v479, %v480
        %v482 = vand.u32 %v481, 4294901760
        %483 = vmatpush.msra.mxu0 %v482
        %v484 = vand.u32 %v344, 4294901760
        %v485 = vsub.f32 %v344, %v484
        %v486 = vand.u32 %v485, 4294901760
        %v487 = vsub.f32 %v485, %v486
        %v488 = vand.u32 %v487, 4294901760
        %489 = vmatpush.msra.mxu0 %v488
        %v490 = vand.u32 %v343, 4294901760
        %v491 = vsub.f32 %v343, %v490
        %v492 = vand.u32 %v491, 4294901760
        %v493 = vsub.f32 %v491, %v492
        %v494 = vand.u32 %v493, 4294901760
        %495 = vmatpush.msra.mxu0 %v494
        %v496 = vand.u32 %v342, 4294901760
        %v497 = vsub.f32 %v342, %v496
        %v498 = vand.u32 %v497, 4294901760
        %v499 = vsub.f32 %v497, %v498
        %v500 = vand.u32 %v499, 4294901760
        %501 = vmatpush.msra.mxu0 %v500
        %v502 = vand.u32 %v341, 4294901760
        %v503 = vsub.f32 %v341, %v502
        %v504 = vand.u32 %v503, 4294901760
        %v505 = vsub.f32 %v503, %v504
        %v506 = vand.u32 %v505, 4294901760
        %507 = vmatpush.msra.mxu0 %v506
        %v508 = vand.u32 %v340, 4294901760
        %v509 = vsub.f32 %v340, %v508
        %v510 = vand.u32 %v509, 4294901760
        %v511 = vsub.f32 %v509, %v510
        %v512 = vand.u32 %v511, 4294901760
        %513 = vmatpush.msra.mxu0 %v512
        %v514 = vand.u32 %v375, 4294901760
        %515 = vmatmul.f32.gmra.mxu0 %v514
        %v516 = vpop.f32.mrf.mxu0
        %v517 = vadd.f32 %v416, %v516
        %518 = vdwg.mxu0
        %v519 = vand.u32 %v355, 4294901760
        %v520 = vsub.f32 %v355, %v519
        %521 = vmatpush.msra.mxu0 %v520
        %v522 = vand.u32 %v354, 4294901760
        %v523 = vsub.f32 %v354, %v522
        %524 = vmatpush.msra.mxu0 %v523
        %v525 = vand.u32 %v353, 4294901760
        %v526 = vsub.f32 %v353, %v525
        %527 = vmatpush.msra.mxu0 %v526
        %v528 = vand.u32 %v352, 4294901760
        %v529 = vsub.f32 %v352, %v528
        %530 = vmatpush.msra.mxu0 %v529
        %v531 = vand.u32 %v351, 4294901760
        %v532 = vsub.f32 %v351, %v531
        %533 = vmatpush.msra.mxu0 %v532
        %v534 = vand.u32 %v350, 4294901760
        %v535 = vsub.f32 %v350, %v534
        %536 = vmatpush.msra.mxu0 %v535
        %v537 = vand.u32 %v349, 4294901760
        %v538 = vsub.f32 %v349, %v537
        %539 = vmatpush.msra.mxu0 %v538
        %v540 = vand.u32 %v348, 4294901760
        %v541 = vsub.f32 %v348, %v540
        %542 = vmatpush.msra.mxu0 %v541
        %v543 = vand.u32 %v347, 4294901760
        %v544 = vsub.f32 %v347, %v543
        %545 = vmatpush.msra.mxu0 %v544
        %v546 = vand.u32 %v346, 4294901760
        %v547 = vsub.f32 %v346, %v546
        %548 = vmatpush.msra.mxu0 %v547
        %v549 = vand.u32 %v345, 4294901760
        %v550 = vsub.f32 %v345, %v549
        %551 = vmatpush.msra.mxu0 %v550
        %v552 = vand.u32 %v344, 4294901760
        %v553 = vsub.f32 %v344, %v552
        %554 = vmatpush.msra.mxu0 %v553
        %v555 = vand.u32 %v343, 4294901760
        %v556 = vsub.f32 %v343, %v555
        %557 = vmatpush.msra.mxu0 %v556
        %v558 = vand.u32 %v342, 4294901760
        %v559 = vsub.f32 %v342, %v558
        %560 = vmatpush.msra.mxu0 %v559
        %v561 = vand.u32 %v341, 4294901760
        %v562 = vsub.f32 %v341, %v561
        %563 = vmatpush.msra.mxu0 %v562
        %v564 = vand.u32 %v340, 4294901760
        %v565 = vsub.f32 %v340, %v564
        %566 = vmatpush.msra.mxu0 %v565
        %v567 = vand.u32 %v375, 4294901760
        %v568 = vsub.f32 %v375, %v567
        %569 = vmatmul.f32.gmra.mxu0 %v568
        %v570 = vpop.f32.mrf.mxu0
        %v571 = vadd.f32 %v517, %v570
        %572 = vdwg.mxu0
        %v573 = vand.u32 %v355, 4294901760
        %574 = vmatpush.msra.mxu0 %v573
        %v575 = vand.u32 %v354, 4294901760
        %576 = vmatpush.msra.mxu0 %v575
        %v577 = vand.u32 %v353, 4294901760
        %578 = vmatpush.msra.mxu0 %v577
        %v579 = vand.u32 %v352, 4294901760
        %580 = vmatpush.msra.mxu0 %v579
        %v581 = vand.u32 %v351, 4294901760
        %582 = vmatpush.msra.mxu0 %v581
        %v583 = vand.u32 %v350, 4294901760
        %584 = vmatpush.msra.mxu0 %v583
        %v585 = vand.u32 %v349, 4294901760
        %586 = vmatpush.msra.mxu0 %v585
        %v587 = vand.u32 %v348, 4294901760
        %588 = vmatpush.msra.mxu0 %v587
        %v589 = vand.u32 %v347, 4294901760
        %590 = vmatpush.msra.mxu0 %v589
        %v591 = vand.u32 %v346, 4294901760
        %592 = vmatpush.msra.mxu0 %v591
        %v593 = vand.u32 %v345, 4294901760
        %594 = vmatpush.msra.mxu0 %v593
        %v595 = vand.u32 %v344, 4294901760
        %596 = vmatpush.msra.mxu0 %v595
        %v597 = vand.u32 %v343, 4294901760
        %598 = vmatpush.msra.mxu0 %v597
        %v599 = vand.u32 %v342, 4294901760
        %600 = vmatpush.msra.mxu0 %v599
        %v601 = vand.u32 %v341, 4294901760
        %602 = vmatpush.msra.mxu0 %v601
        %v603 = vand.u32 %v340, 4294901760
        %604 = vmatpush.msra.mxu0 %v603
        %v605 = vand.u32 %v375, 4294901760
        %v606 = vsub.f32 %v375, %v605
        %v607 = vand.u32 %v606, 4294901760
        %608 = vmatmul.f32.gmra.mxu0 %v607
        %v609 = vpop.f32.mrf.mxu0
        %v610 = vadd.f32 %v571, %v609
        %611 = vdwg.mxu0
        %v612 = vand.u32 %v355, 4294901760
        %v613 = vsub.f32 %v355, %v612
        %v614 = vand.u32 %v613, 4294901760
        %615 = vmatpush.msra.mxu0 %v614
        %v616 = vand.u32 %v354, 4294901760
        %v617 = vsub.f32 %v354, %v616
        %v618 = vand.u32 %v617, 4294901760
        %619 = vmatpush.msra.mxu0 %v618
        %v620 = vand.u32 %v353, 4294901760
        %v621 = vsub.f32 %v353, %v620
        %v622 = vand.u32 %v621, 4294901760
        %623 = vmatpush.msra.mxu0 %v622
        %v624 = vand.u32 %v352, 4294901760
        %v625 = vsub.f32 %v352, %v624
        %v626 = vand.u32 %v625, 4294901760
        %627 = vmatpush.msra.mxu0 %v626
        %v628 = vand.u32 %v351, 4294901760
        %v629 = vsub.f32 %v351, %v628
        %v630 = vand.u32 %v629, 4294901760
        %631 = vmatpush.msra.mxu0 %v630
        %v632 = vand.u32 %v350, 4294901760
        %v633 = vsub.f32 %v350, %v632
        %v634 = vand.u32 %v633, 4294901760
        %635 = vmatpush.msra.mxu0 %v634
        %v636 = vand.u32 %v349, 4294901760
        %v637 = vsub.f32 %v349, %v636
        %v638 = vand.u32 %v637, 4294901760
        %639 = vmatpush.msra.mxu0 %v638
        %v640 = vand.u32 %v348, 4294901760
        %v641 = vsub.f32 %v348, %v640
        %v642 = vand.u32 %v641, 4294901760
        %643 = vmatpush.msra.mxu0 %v642
        %v644 = vand.u32 %v347, 4294901760
        %v645 = vsub.f32 %v347, %v644
        %v646 = vand.u32 %v645, 4294901760
        %647 = vmatpush.msra.mxu0 %v646
        %v648 = vand.u32 %v346, 4294901760
        %v649 = vsub.f32 %v346, %v648
        %v650 = vand.u32 %v649, 4294901760
        %651 = vmatpush.msra.mxu0 %v650
        %v652 = vand.u32 %v345, 4294901760
        %v653 = vsub.f32 %v345, %v652
        %v654 = vand.u32 %v653, 4294901760
        %655 = vmatpush.msra.mxu0 %v654
        %v656 = vand.u32 %v344, 4294901760
        %v657 = vsub.f32 %v344, %v656
        %v658 = vand.u32 %v657, 4294901760
        %659 = vmatpush.msra.mxu0 %v658
        %v660 = vand.u32 %v343, 4294901760
        %v661 = vsub.f32 %v343, %v660
        %v662 = vand.u32 %v661, 4294901760
        %663 = vmatpush.msra.mxu0 %v662
        %v664 = vand.u32 %v342, 4294901760
        %v665 = vsub.f32 %v342, %v664
        %v666 = vand.u32 %v665, 4294901760
        %667 = vmatpush.msra.mxu0 %v666
        %v668 = vand.u32 %v341, 4294901760
        %v669 = vsub.f32 %v341, %v668
        %v670 = vand.u32 %v669, 4294901760
        %671 = vmatpush.msra.mxu0 %v670
        %v672 = vand.u32 %v340, 4294901760
        %v673 = vsub.f32 %v340, %v672
        %v674 = vand.u32 %v673, 4294901760
        %675 = vmatpush.msra.mxu0 %v674
        %v676 = vand.u32 %v375, 4294901760
        %677 = vmatmul.f32.gmra.mxu0 %v676
        %v678 = vpop.f32.mrf.mxu0
        %v679 = vadd.f32 %v610, %v678
        %680 = vdwg.mxu0
        %v681 = vand.u32 %v355, 4294901760
        %682 = vmatpush.msra.mxu0 %v681
        %v683 = vand.u32 %v354, 4294901760
        %684 = vmatpush.msra.mxu0 %v683
        %v685 = vand.u32 %v353, 4294901760
        %686 = vmatpush.msra.mxu0 %v685
        %v687 = vand.u32 %v352, 4294901760
        %688 = vmatpush.msra.mxu0 %v687
        %v689 = vand.u32 %v351, 4294901760
        %690 = vmatpush.msra.mxu0 %v689
        %v691 = vand.u32 %v350, 4294901760
        %692 = vmatpush.msra.mxu0 %v691
        %v693 = vand.u32 %v349, 4294901760
        %694 = vmatpush.msra.mxu0 %v693
        %v695 = vand.u32 %v348, 4294901760
        %696 = vmatpush.msra.mxu0 %v695
        %v697 = vand.u32 %v347, 4294901760
        %698 = vmatpush.msra.mxu0 %v697
        %v699 = vand.u32 %v346, 4294901760
        %700 = vmatpush.msra.mxu0 %v699
        %v701 = vand.u32 %v345, 4294901760
        %702 = vmatpush.msra.mxu0 %v701
        %v703 = vand.u32 %v344, 4294901760
        %704 = vmatpush.msra.mxu0 %v703
        %v705 = vand.u32 %v343, 4294901760
        %706 = vmatpush.msra.mxu0 %v705
        %v707 = vand.u32 %v342, 4294901760
        %708 = vmatpush.msra.mxu0 %v707
        %v709 = vand.u32 %v341, 4294901760
        %710 = vmatpush.msra.mxu0 %v709
        %v711 = vand.u32 %v340, 4294901760
        %712 = vmatpush.msra.mxu0 %v711
        %v713 = vand.u32 %v375, 4294901760
        %714 = vmatmul.f32.gmra.mxu0 %v713
        %v715 = vpop.f32.mrf.mxu0
        %v716 = vadd.f32 %v679, %v715
        %717 = vdwg.mxu0
        %v718 = vld [vmem:[%s6] sm:$0x1]
        %v719 = vld [vmem:[%s6 + $0x1] sm:$0x1]
        %vm720 = vcmask 122880
        %v721 = vsel %vm720, %v716, 0.0
        %722 = vadd.xlane.f32.xlu0 %v721
        %v723 = vpop.xlane.xlu0 %722
        %v724 = vrcp.pop 16.0
        %v725 = vmul.f32 16.0, %v724
        %v726 = vsub.f32 1.0, %v725
        %v727 = vmul.f32 %v724, %v726
        %v728 = vadd.f32 %v724, %v727
        %vm729 = vweird.f32 %v724
        %v730 = vsel %vm729, %v724, %v728
        %v731 = vmul.f32 %v723, %v730
        %v732 = vsub.f32 %v716, %v731
        %v733 = vmul.f32 %v732, %v732
        %v734 = vsel %vm720, %v733, 0.0
        %735 = vadd.xlane.f32.xlu0 %v734
        %v736 = vpop.xlane.xlu0 %735
        %v737 = vmul.f32 %v736, %v730
        %v738 = vadd.f32 %v737, 1e-05
        %v739 = vrsqrt.pop %v738
        %v740 = vmul.f32 %v739, %v738
        %v741 = vmul.f32 %v740, %v739
        %v742 = vmul.f32 0.5, %v741
        %v743 = vsub.f32 1.5, %v742
        %v744 = vmul.f32 %v739, %v743
        %vm745 = vweird.f32 %v738
        %vm746 = vweird.f32 %v739
        %vm747 = vmor %vm745, %vm746
        %v748 = vsel %vm747, %v739, %v744
        %v749 = vmul.f32 %v732, %v748
        %v750 = vmul.f32 %v749, %v718
        %v751 = vadd.f32 %v750, %v719
        %v752 = vmul.f32 %v751, 0.5
        %v753 = vmul.f32 %v751, 0.70710677
        %v754 = vmul.f32 %v753, %v753
        %v755 = vmin.f32 16.0, %v754
        %v756 = vmul.f32 %v755, 2.1237322e-06
        %v757 = vadd.f32 %v756, 0.00028619796
        %v758 = vmul.f32 %v755, %v757
        %v759 = vadd.f32 %v758, 0.0036580483
        %v760 = vmul.f32 %v755, %v759
        %v761 = vadd.f32 %v760, 0.05243302
        %v762 = vmul.f32 %v755, %v761
        %v763 = vadd.f32 %v762, 0.18741608
        %v764 = vmul.f32 %v755, %v763
        %v765 = vadd.f32 %v764, 1.1283791
        %v766 = vmul.f32 %v753, %v765
        %v767 = vmul.f32 %v755, 3.8918573e-05
        %v768 = vadd.f32 %v767, 0.001143296
        %v769 = vmul.f32 %v755, %v768
        %v770 = vadd.f32 %v769, 0.014752088
        %v771 = vmul.f32 %v755, %v770
        %v772 = vadd.f32 %v771, 0.112945676
        %v773 = vmul.f32 %v755, %v772
        %v774 = vadd.f32 %v773, 0.4994258
        %v775 = vmul.f32 %v755, %v774
        %v776 = vadd.f32 %v775, 1.0
        %v777 = vrcp.pop %v776
        %v778 = vmul.f32 %v776, %v777
        %v779 = vsub.f32 1.0, %v778
        %v780 = vmul.f32 %v777, %v779
        %v781 = vadd.f32 %v777, %v780
        %vm782 = vweird.f32 %v776
        %vm783 = vweird.f32 %v777
        %vm784 = vmor %vm782, %vm783
        %v785 = vsel %vm784, %v777, %v781
        %v786 = vand.u32 2147483647, %v776
        %vm787 = vcmp.eq.f32.partialorder %v786, 8.507059e+37
        %v788 = vand.u32 %v776, 2147483648
        %v789 = vor.u32 1.1754944e-38, %v788
        %v790 = vsel %vm787, %v789, %v785
        %v791 = vmul.f32 %v766, %v790
        %v792 = vmin.f32 %v791, 1.0
        %v793 = vmax.f32 %v792, -1.0
        %v794 = vadd.f32 %v793, 1.0
        %v795 = vmul.f32 %v752, %v794
        %v796 = vstv %s339
        %v797 = vand.u32 %v371, 4294901760
        %798 = vmatpush.msra.mxu0 %v797
        %v799 = vand.u32 %v370, 4294901760
        %800 = vmatpush.msra.mxu0 %v799
        %v801 = vand.u32 %v369, 4294901760
        %802 = vmatpush.msra.mxu0 %v801
        %v803 = vand.u32 %v368, 4294901760
        %804 = vmatpush.msra.mxu0 %v803
        %v805 = vand.u32 %v367, 4294901760
        %806 = vmatpush.msra.mxu0 %v805
        %v807 = vand.u32 %v366, 4294901760
        %808 = vmatpush.msra.mxu0 %v807
        %v809 = vand.u32 %v365, 4294901760
        %810 = vmatpush.msra.mxu0 %v809
        %v811 = vand.u32 %v364, 4294901760
        %812 = vmatpush.msra.mxu0 %v811
        %v813 = vand.u32 %v363, 4294901760
        %814 = vmatpush.msra.mxu0 %v813
        %v815 = vand.u32 %v362, 4294901760
        %816 = vmatpush.msra.mxu0 %v815
        %v817 = vand.u32 %v361, 4294901760
        %818 = vmatpush.msra.mxu0 %v817
        %v819 = vand.u32 %v360, 4294901760
        %820 = vmatpush.msra.mxu0 %v819
        %v821 = vand.u32 %v359, 4294901760
        %822 = vmatpush.msra.mxu0 %v821
        %v823 = vand.u32 %v358, 4294901760
        %824 = vmatpush.msra.mxu0 %v823
        %v825 = vand.u32 %v357, 4294901760
        %826 = vmatpush.msra.mxu0 %v825
        %v827 = vand.u32 %v356, 4294901760
        %828 = vmatpush.msra.mxu0 %v827
        %v829 = vand.u32 %v375, 4294901760
        %v830 = vsub.f32 %v375, %v829
        %v831 = vand.u32 %v830, 4294901760
        %v832 = vsub.f32 %v830, %v831
        %v833 = vand.u32 %v832, 4294901760
        %834 = vmatmul.f32.gmra.mxu0 %v833
        %v835 = vpop.f32.mrf.mxu0
        %v836 = vadd.f32 %v796, %v835
        %837 = vdwg.mxu0
        %v838 = vand.u32 %v371, 4294901760
        %v839 = vsub.f32 %v371, %v838
        %v840 = vand.u32 %v839, 4294901760
        %v841 = vsub.f32 %v839, %v840
        %v842 = vand.u32 %v841, 4294901760
        %843 = vmatpush.msra.mxu0 %v842
        %v844 = vand.u32 %v370, 4294901760
        %v845 = vsub.f32 %v370, %v844
        %v846 = vand.u32 %v845, 4294901760
        %v847 = vsub.f32 %v845, %v846
        %v848 = vand.u32 %v847, 4294901760
        %849 = vmatpush.msra.mxu0 %v848
        %v850 = vand.u32 %v369, 4294901760
        %v851 = vsub.f32 %v369, %v850
        %v852 = vand.u32 %v851, 4294901760
        %v853 = vsub.f32 %v851, %v852
        %v854 = vand.u32 %v853, 4294901760
        %855 = vmatpush.msra.mxu0 %v854
        %v856 = vand.u32 %v368, 4294901760
        %v857 = vsub.f32 %v368, %v856
        %v858 = vand.u32 %v857, 4294901760
        %v859 = vsub.f32 %v857, %v858
        %v860 = vand.u32 %v859, 4294901760
        %861 = vmatpush.msra.mxu0 %v860
        %v862 = vand.u32 %v367, 4294901760
        %v863 = vsub.f32 %v367, %v862
        %v864 = vand.u32 %v863, 4294901760
        %v865 = vsub.f32 %v863, %v864
        %v866 = vand.u32 %v865, 4294901760
        %867 = vmatpush.msra.mxu0 %v866
        %v868 = vand.u32 %v366, 4294901760
        %v869 = vsub.f32 %v366, %v868
        %v870 = vand.u32 %v869, 4294901760
        %v871 = vsub.f32 %v869, %v870
        %v872 = vand.u32 %v871, 4294901760
        %873 = vmatpush.msra.mxu0 %v872
        %v874 = vand.u32 %v365, 4294901760
        %v875 = vsub.f32 %v365, %v874
        %v876 = vand.u32 %v875, 4294901760
        %v877 = vsub.f32 %v875, %v876
        %v878 = vand.u32 %v877, 4294901760
        %879 = vmatpush.msra.mxu0 %v878
        %v880 = vand.u32 %v364, 4294901760
        %v881 = vsub.f32 %v364, %v880
        %v882 = vand.u32 %v881, 4294901760
        %v883 = vsub.f32 %v881, %v882
        %v884 = vand.u32 %v883, 4294901760
        %885 = vmatpush.msra.mxu0 %v884
        %v886 = vand.u32 %v363, 4294901760
        %v887 = vsub.f32 %v363, %v886
        %v888 = vand.u32 %v887, 4294901760
        %v889 = vsub.f32 %v887, %v888
        %v890 = vand.u32 %v889, 4294901760
        %891 = vmatpush.msra.mxu0 %v890
        %v892 = vand.u32 %v362, 4294901760
        %v893 = vsub.f32 %v362, %v892
        %v894 = vand.u32 %v893, 4294901760
        %v895 = vsub.f32 %v893, %v894
        %v896 = vand.u32 %v895, 4294901760
        %897 = vmatpush.msra.mxu0 %v896
        %v898 = vand.u32 %v361, 4294901760
        %v899 = vsub.f32 %v361, %v898
        %v900 = vand.u32 %v899, 4294901760
        %v901 = vsub.f32 %v899, %v900
        %v902 = vand.u32 %v901, 4294901760
        %903 = vmatpush.msra.mxu0 %v902
        %v904 = vand.u32 %v360, 4294901760
        %v905 = vsub.f32 %v360, %v904
        %v906 = vand.u32 %v905, 4294901760
        %v907 = vsub.f32 %v905, %v906
        %v908 = vand.u32 %v907, 4294901760
        %909 = vmatpush.msra.mxu0 %v908
        %v910 = vand.u32 %v359, 4294901760
        %v911 = vsub.f32 %v359, %v910
        %v912 = vand.u32 %v911, 4294901760
        %v913 = vsub.f32 %v911, %v912
        %v914 = vand.u32 %v913, 4294901760
        %915 = vmatpush.msra.mxu0 %v914
        %v916 = vand.u32 %v358, 4294901760
        %v917 = vsub.f32 %v358, %v916
        %v918 = vand.u32 %v917, 4294901760
        %v919 = vsub.f32 %v917, %v918
        %v920 = vand.u32 %v919, 4294901760
        %921 = vmatpush.msra.mxu0 %v920
        %v922 = vand.u32 %v357, 4294901760
        %v923 = vsub.f32 %v357, %v922
        %v924 = vand.u32 %v923, 4294901760
        %v925 = vsub.f32 %v923, %v924
        %v926 = vand.u32 %v925, 4294901760
        %927 = vmatpush.msra.mxu0 %v926
        %v928 = vand.u32 %v356, 4294901760
        %v929 = vsub.f32 %v356, %v928
        %v930 = vand.u32 %v929, 4294901760
        %v931 = vsub.f32 %v929, %v930
        %v932 = vand.u32 %v931, 4294901760
        %933 = vmatpush.msra.mxu0 %v932
        %v934 = vand.u32 %v375, 4294901760
        %935 = vmatmul.f32.gmra.mxu0 %v934
        %v936 = vpop.f32.mrf.mxu0
        %v937 = vadd.f32 %v836, %v936
        %938 = vdwg.mxu0
        %v939 = vand.u32 %v371, 4294901760
        %v940 = vsub.f32 %v371, %v939
        %941 = vmatpush.msra.mxu0 %v940
        %v942 = vand.u32 %v370, 4294901760
        %v943 = vsub.f32 %v370, %v942
        %944 = vmatpush.msra.mxu0 %v943
        %v945 = vand.u32 %v369, 4294901760
        %v946 = vsub.f32 %v369, %v945
        %947 = vmatpush.msra.mxu0 %v946
        %v948 = vand.u32 %v368, 4294901760
        %v949 = vsub.f32 %v368, %v948
        %950 = vmatpush.msra.mxu0 %v949
        %v951 = vand.u32 %v367, 4294901760
        %v952 = vsub.f32 %v367, %v951
        %953 = vmatpush.msra.mxu0 %v952
        %v954 = vand.u32 %v366, 4294901760
        %v955 = vsub.f32 %v366, %v954
        %956 = vmatpush.msra.mxu0 %v955
        %v957 = vand.u32 %v365, 4294901760
        %v958 = vsub.f32 %v365, %v957
        %959 = vmatpush.msra.mxu0 %v958
        %v960 = vand.u32 %v364, 4294901760
        %v961 = vsub.f32 %v364, %v960
        %962 = vmatpush.msra.mxu0 %v961
        %v963 = vand.u32 %v363, 4294901760
        %v964 = vsub.f32 %v363, %v963
        %965 = vmatpush.msra.mxu0 %v964
        %v966 = vand.u32 %v362, 4294901760
        %v967 = vsub.f32 %v362, %v966
        %968 = vmatpush.msra.mxu0 %v967
        %v969 = vand.u32 %v361, 4294901760
        %v970 = vsub.f32 %v361, %v969
        %971 = vmatpush.msra.mxu0 %v970
        %v972 = vand.u32 %v360, 4294901760
        %v973 = vsub.f32 %v360, %v972
        %974 = vmatpush.msra.mxu0 %v973
        %v975 = vand.u32 %v359, 4294901760
        %v976 = vsub.f32 %v359, %v975
        %977 = vmatpush.msra.mxu0 %v976
        %v978 = vand.u32 %v358, 4294901760
        %v979 = vsub.f32 %v358, %v978
        %980 = vmatpush.msra.mxu0 %v979
        %v981 = vand.u32 %v357, 4294901760
        %v982 = vsub.f32 %v357, %v981
        %983 = vmatpush.msra.mxu0 %v982
        %v984 = vand.u32 %v356, 4294901760
        %v985 = vsub.f32 %v356, %v984
        %986 = vmatpush.msra.mxu0 %v985
        %v987 = vand.u32 %v375, 4294901760
        %v988 = vsub.f32 %v375, %v987
        %989 = vmatmul.f32.gmra.mxu0 %v988
        %v990 = vpop.f32.mrf.mxu0
        %v991 = vadd.f32 %v937, %v990
        %992 = vdwg.mxu0
        %v993 = vand.u32 %v371, 4294901760
        %994 = vmatpush.msra.mxu0 %v993
        %v995 = vand.u32 %v370, 4294901760
        %996 = vmatpush.msra.mxu0 %v995
        %v997 = vand.u32 %v369, 4294901760
        %998 = vmatpush.msra.mxu0 %v997
        %v999 = vand.u32 %v368, 4294901760
        %1000 = vmatpush.msra.mxu0 %v999
        %v1001 = vand.u32 %v367, 4294901760
        %1002 = vmatpush.msra.mxu0 %v1001
        %v1003 = vand.u32 %v366, 4294901760
        %1004 = vmatpush.msra.mxu0 %v1003
        %v1005 = vand.u32 %v365, 4294901760
        %1006 = vmatpush.msra.mxu0 %v1005
        %v1007 = vand.u32 %v364, 4294901760
        %1008 = vmatpush.msra.mxu0 %v1007
        %v1009 = vand.u32 %v363, 4294901760
        %1010 = vmatpush.msra.mxu0 %v1009
        %v1011 = vand.u32 %v362, 4294901760
        %1012 = vmatpush.msra.mxu0 %v1011
        %v1013 = vand.u32 %v361, 4294901760
        %1014 = vmatpush.msra.mxu0 %v1013
        %v1015 = vand.u32 %v360, 4294901760
        %1016 = vmatpush.msra.mxu0 %v1015
        %v1017 = vand.u32 %v359, 4294901760
        %1018 = vmatpush.msra.mxu0 %v1017
        %v1019 = vand.u32 %v358, 4294901760
        %1020 = vmatpush.msra.mxu0 %v1019
        %v1021 = vand.u32 %v357, 4294901760
        %1022 = vmatpush.msra.mxu0 %v1021
        %v1023 = vand.u32 %v356, 4294901760
        %1024 = vmatpush.msra.mxu0 %v1023
        %v1025 = vand.u32 %v375, 4294901760
        %v1026 = vsub.f32 %v375, %v1025
        %v1027 = vand.u32 %v1026, 4294901760
        %1028 = vmatmul.f32.gmra.mxu0 %v1027
        %v1029 = vpop.f32.mrf.mxu0
        %v1030 = vadd.f32 %v991, %v1029
        %1031 = vdwg.mxu0
        %v1032 = vand.u32 %v371, 4294901760
        %v1033 = vsub.f32 %v371, %v1032
        %v1034 = vand.u32 %v1033, 4294901760
        %1035 = vmatpush.msra.mxu0 %v1034
        %v1036 = vand.u32 %v370, 4294901760
        %v1037 = vsub.f32 %v370, %v1036
        %v1038 = vand.u32 %v1037, 4294901760
        %1039 = vmatpush.msra.mxu0 %v1038
        %v1040 = vand.u32 %v369, 4294901760
        %v1041 = vsub.f32 %v369, %v1040
        %v1042 = vand.u32 %v1041, 4294901760
        %1043 = vmatpush.msra.mxu0 %v1042
        %v1044 = vand.u32 %v368, 4294901760
        %v1045 = vsub.f32 %v368, %v1044
        %v1046 = vand.u32 %v1045, 4294901760
        %1047 = vmatpush.msra.mxu0 %v1046
        %v1048 = vand.u32 %v367, 4294901760
        %v1049 = vsub.f32 %v367, %v1048
        %v1050 = vand.u32 %v1049, 4294901760
        %1051 = vmatpush.msra.mxu0 %v1050
        %v1052 = vand.u32 %v366, 4294901760
        %v1053 = vsub.f32 %v366, %v1052
        %v1054 = vand.u32 %v1053, 4294901760
        %1055 = vmatpush.msra.mxu0 %v1054
        %v1056 = vand.u32 %v365, 4294901760
        %v1057 = vsub.f32 %v365, %v1056
        %v1058 = vand.u32 %v1057, 4294901760
        %1059 = vmatpush.msra.mxu0 %v1058
        %v1060 = vand.u32 %v364, 4294901760
        %v1061 = vsub.f32 %v364, %v1060
        %v1062 = vand.u32 %v1061, 4294901760
        %1063 = vmatpush.msra.mxu0 %v1062
        %v1064 = vand.u32 %v363, 4294901760
        %v1065 = vsub.f32 %v363, %v1064
        %v1066 = vand.u32 %v1065, 4294901760
        %1067 = vmatpush.msra.mxu0 %v1066
        %v1068 = vand.u32 %v362, 4294901760
        %v1069 = vsub.f32 %v362, %v1068
        %v1070 = vand.u32 %v1069, 4294901760
        %1071 = vmatpush.msra.mxu0 %v1070
        %v1072 = vand.u32 %v361, 4294901760
        %v1073 = vsub.f32 %v361, %v1072
        %v1074 = vand.u32 %v1073, 4294901760
        %1075 = vmatpush.msra.mxu0 %v1074
        %v1076 = vand.u32 %v360, 4294901760
        %v1077 = vsub.f32 %v360, %v1076
        %v1078 = vand.u32 %v1077, 4294901760
        %1079 = vmatpush.msra.mxu0 %v1078
        %v1080 = vand.u32 %v359, 4294901760
        %v1081 = vsub.f32 %v359, %v1080
        %v1082 = vand.u32 %v1081, 4294901760
        %1083 = vmatpush.msra.mxu0 %v1082
        %v1084 = vand.u32 %v358, 4294901760
        %v1085 = vsub.f32 %v358, %v1084
        %v1086 = vand.u32 %v1085, 4294901760
        %1087 = vmatpush.msra.mxu0 %v1086
        %v1088 = vand.u32 %v357, 4294901760
        %v1089 = vsub.f32 %v357, %v1088
        %v1090 = vand.u32 %v1089, 4294901760
        %1091 = vmatpush.msra.mxu0 %v1090
        %v1092 = vand.u32 %v356, 4294901760
        %v1093 = vsub.f32 %v356, %v1092
        %v1094 = vand.u32 %v1093, 4294901760
        %1095 = vmatpush.msra.mxu0 %v1094
        %v1096 = vand.u32 %v375, 4294901760
        %1097 = vmatmul.f32.gmra.mxu0 %v1096
        %v1098 = vpop.f32.mrf.mxu0
        %v1099 = vadd.f32 %v1030, %v1098
        %1100 = vdwg.mxu0
        %v1101 = vand.u32 %v371, 4294901760
        %1102 = vmatpush.msra.mxu0 %v1101
        %v1103 = vand.u32 %v370, 4294901760
        %1104 = vmatpush.msra.mxu0 %v1103
        %v1105 = vand.u32 %v369, 4294901760
        %1106 = vmatpush.msra.mxu0 %v1105
        %v1107 = vand.u32 %v368, 4294901760
        %1108 = vmatpush.msra.mxu0 %v1107
        %v1109 = vand.u32 %v367, 4294901760
        %1110 = vmatpush.msra.mxu0 %v1109
        %v1111 = vand.u32 %v366, 4294901760
        %1112 = vmatpush.msra.mxu0 %v1111
        %v1113 = vand.u32 %v365, 4294901760
        %1114 = vmatpush.msra.mxu0 %v1113
        %v1115 = vand.u32 %v364, 4294901760
        %1116 = vmatpush.msra.mxu0 %v1115
        %v1117 = vand.u32 %v363, 4294901760
        %1118 = vmatpush.msra.mxu0 %v1117
        %v1119 = vand.u32 %v362, 4294901760
        %1120 = vmatpush.msra.mxu0 %v1119
        %v1121 = vand.u32 %v361, 4294901760
        %1122 = vmatpush.msra.mxu0 %v1121
        %v1123 = vand.u32 %v360, 4294901760
        %1124 = vmatpush.msra.mxu0 %v1123
        %v1125 = vand.u32 %v359, 4294901760
        %1126 = vmatpush.msra.mxu0 %v1125
        %v1127 = vand.u32 %v358, 4294901760
        %1128 = vmatpush.msra.mxu0 %v1127
        %v1129 = vand.u32 %v357, 4294901760
        %1130 = vmatpush.msra.mxu0 %v1129
        %v1131 = vand.u32 %v356, 4294901760
        %1132 = vmatpush.msra.mxu0 %v1131
        %v1133 = vand.u32 %v375, 4294901760
        %1134 = vmatmul.f32.gmra.mxu0 %v1133
        %v1135 = vpop.f32.mrf.mxu0
        %v1136 = vadd.f32 %v1099, %v1135
        %1137 = vdwg.mxu0
        %v1138 = vld [vmem:[%s7] sm:$0x1]
        %v1139 = vld [vmem:[%s7 + $0x1] sm:$0x1]
        %vm1140 = vcmask 57344
        %v1141 = vsel %vm1140, %v1136, 0.0
        %1142 = vadd.xlane.f32.xlu0 %v1141
        %v1143 = vpop.xlane.xlu0 %1142
        %v1144 = vrcp.pop 8.0
        %v1145 = vmul.f32 8.0, %v1144
        %v1146 = vsub.f32 1.0, %v1145
        %v1147 = vmul.f32 %v1144, %v1146
        %v1148 = vadd.f32 %v1144, %v1147
        %vm1149 = vweird.f32 %v1144
        %v1150 = vsel %vm1149, %v1144, %v1148
        %v1151 = vmul.f32 %v1143, %v1150
        %v1152 = vsub.f32 %v1136, %v1151
        %v1153 = vmul.f32 %v1152, %v1152
        %v1154 = vsel %vm1140, %v1153, 0.0
        %1155 = vadd.xlane.f32.xlu0 %v1154
        %v1156 = vpop.xlane.xlu0 %1155
        %v1157 = vmul.f32 %v1156, %v1150
        %v1158 = vadd.f32 %v1157, 1e-05
        %v1159 = vrsqrt.pop %v1158
        %v1160 = vmul.f32 %v1159, %v1158
        %v1161 = vmul.f32 %v1160, %v1159
        %v1162 = vmul.f32 0.5, %v1161
        %v1163 = vsub.f32 1.5, %v1162
        %v1164 = vmul.f32 %v1159, %v1163
        %vm1165 = vweird.f32 %v1158
        %vm1166 = vweird.f32 %v1159
        %vm1167 = vmor %vm1165, %vm1166
        %v1168 = vsel %vm1167, %v1159, %v1164
        %v1169 = vmul.f32 %v1152, %v1168
        %v1170 = vmul.f32 %v1169, %v1138
        %v1171 = vadd.f32 %v1170, %v1139
        %v1172 = vmul.f32 %v1171, 0.5
        %v1173 = vmul.f32 %v1171, 0.70710677
        %v1174 = vmul.f32 %v1173, %v1173
        %v1175 = vmin.f32 16.0, %v1174
        %v1176 = vmul.f32 %v1175, 2.1237322e-06
        %v1177 = vadd.f32 %v1176, 0.00028619796
        %v1178 = vmul.f32 %v1175, %v1177
        %v1179 = vadd.f32 %v1178, 0.0036580483
        %v1180 = vmul.f32 %v1175, %v1179
        %v1181 = vadd.f32 %v1180, 0.05243302
        %v1182 = vmul.f32 %v1175, %v1181
        %v1183 = vadd.f32 %v1182, 0.18741608
        %v1184 = vmul.f32 %v1175, %v1183
        %v1185 = vadd.f32 %v1184, 1.1283791
        %v1186 = vmul.f32 %v1173, %v1185
        %v1187 = vmul.f32 %v1175, 3.8918573e-05
        %v1188 = vadd.f32 %v1187, 0.001143296
        %v1189 = vmul.f32 %v1175, %v1188
        %v1190 = vadd.f32 %v1189, 0.014752088
        %v1191 = vmul.f32 %v1175, %v1190
        %v1192 = vadd.f32 %v1191, 0.112945676
        %v1193 = vmul.f32 %v1175, %v1192
        %v1194 = vadd.f32 %v1193, 0.4994258
        %v1195 = vmul.f32 %v1175, %v1194
        %v1196 = vadd.f32 %v1195, 1.0
        %v1197 = vrcp.pop %v1196
        %v1198 = vmul.f32 %v1196, %v1197
        %v1199 = vsub.f32 1.0, %v1198
        %v1200 = vmul.f32 %v1197, %v1199
        %v1201 = vadd.f32 %v1197, %v1200
        %vm1202 = vweird.f32 %v1196
        %vm1203 = vweird.f32 %v1197
        %vm1204 = vmor %vm1202, %vm1203
        %v1205 = vsel %vm1204, %v1197, %v1201
        %v1206 = vand.u32 2147483647, %v1196
        %vm1207 = vcmp.eq.f32.partialorder %v1206, 8.507059e+37
        %v1208 = vand.u32 %v1196, 2147483648
        %v1209 = vor.u32 1.1754944e-38, %v1208
        %v1210 = vsel %vm1207, %v1209, %v1205
        %v1211 = vmul.f32 %v1186, %v1210
        %v1212 = vmin.f32 %v1211, 1.0
        %v1213 = vmax.f32 %v1212, -1.0
        %v1214 = vadd.f32 %v1213, 1.0
        %v1215 = vmul.f32 %v1172, %v1214
        %vm1216 = vcmask 130048
        %v1218 = vsel %vm1216, %v795, 0
        %1220 = vmatpush.msra.mxu0 0.0
        %1221 = vmatpush.msra.mxu0 0.0
        %1222 = vmatpush.msra.mxu0 0.0
        %1223 = vmatpush.msra.mxu0 0.0
        %1224 = vmatpush.msra.mxu0 0.0
        %1225 = vmatpush.msra.mxu0 0.0
        %1226 = vmatpush.msra.mxu0 0.0
        %1227 = vmatpush.msra.mxu0 0.0
        %1228 = vmatpush.msra.mxu0 0.0
        %1229 = vmatpush.msra.mxu0 0.0
        %1230 = vmatpush.msra.mxu0 0.0
        %1231 = vmatpush.msra.mxu0 0.0
        %1232 = vmatpush.msra.mxu0 0.0
        %1233 = vmatpush.msra.mxu0 0.0
        %v1234 = vand.u32 %v373, 4294901760
        %1235 = vmatpush.msra.mxu0 %v1234
        %v1236 = vand.u32 %v372, 4294901760
        %1237 = vmatpush.msra.mxu0 %v1236
        %v1238 = vand.u32 %v1218, 4294901760
        %v1239 = vsub.f32 %v1218, %v1238
        %v1240 = vand.u32 %v1239, 4294901760
        %v1241 = vsub.f32 %v1239, %v1240
        %v1242 = vand.u32 %v1241, 4294901760
        %1243 = vmatmul.f32.gmra.mxu0 %v1242
        %v1244 = vpop.f32.mrf.mxu0
        %v1245 = vadd.f32 0.0, %v1244
        %1246 = vdwg.mxu0
        %1247 = vmatpush.msra.mxu0 0.0
        %1248 = vmatpush.msra.mxu0 0.0
        %1249 = vmatpush.msra.mxu0 0.0
        %1250 = vmatpush.msra.mxu0 0.0
        %1251 = vmatpush.msra.mxu0 0.0
        %1252 = vmatpush.msra.mxu0 0.0
        %1253 = vmatpush.msra.mxu0 0.0
        %1254 = vmatpush.msra.mxu0 0.0
        %1255 = vmatpush.msra.mxu0 0.0
        %1256 = vmatpush.msra.mxu0 0.0
        %1257 = vmatpush.msra.mxu0 0.0
        %1258 = vmatpush.msra.mxu0 0.0
        %1259 = vmatpush.msra.mxu0 0.0
        %1260 = vmatpush.msra.mxu0 0.0
        %v1261 = vand.u32 %v373, 4294901760
        %v1262 = vsub.f32 %v373, %v1261
        %v1263 = vand.u32 %v1262, 4294901760
        %v1264 = vsub.f32 %v1262, %v1263
        %v1265 = vand.u32 %v1264, 4294901760
        %1266 = vmatpush.msra.mxu0 %v1265
        %v1267 = vand.u32 %v372, 4294901760
        %v1268 = vsub.f32 %v372, %v1267
        %v1269 = vand.u32 %v1268, 4294901760
        %v1270 = vsub.f32 %v1268, %v1269
        %v1271 = vand.u32 %v1270, 4294901760
        %1272 = vmatpush.msra.mxu0 %v1271
        %v1273 = vand.u32 %v1218, 4294901760
        %1274 = vmatmul.f32.gmra.mxu0 %v1273
        %v1275 = vpop.f32.mrf.mxu0
        %v1276 = vadd.f32 %v1245, %v1275
        %1277 = vdwg.mxu0
        %1278 = vmatpush.msra.mxu0 0.0
        %1279 = vmatpush.msra.mxu0 0.0
        %1280 = vmatpush.msra.mxu0 0.0
        %1281 = vmatpush.msra.mxu0 0.0
        %1282 = vmatpush.msra.mxu0 0.0
        %1283 = vmatpush.msra.mxu0 0.0
        %1284 = vmatpush.msra.mxu0 0.0
        %1285 = vmatpush.msra.mxu0 0.0
        %1286 = vmatpush.msra.mxu0 0.0
        %1287 = vmatpush.msra.mxu0 0.0
        %1288 = vmatpush.msra.mxu0 0.0
        %1289 = vmatpush.msra.mxu0 0.0
        %1290 = vmatpush.msra.mxu0 0.0
        %1291 = vmatpush.msra.mxu0 0.0
        %v1292 = vand.u32 %v373, 4294901760
        %v1293 = vsub.f32 %v373, %v1292
        %1294 = vmatpush.msra.mxu0 %v1293
        %v1295 = vand.u32 %v372, 4294901760
        %v1296 = vsub.f32 %v372, %v1295
        %1297 = vmatpush.msra.mxu0 %v1296
        %v1298 = vand.u32 %v1218, 4294901760
        %v1299 = vsub.f32 %v1218, %v1298
        %1300 = vmatmul.f32.gmra.mxu0 %v1299
        %v1301 = vpop.f32.mrf.mxu0
        %v1302 = vadd.f32 %v1276, %v1301
        %1303 = vdwg.mxu0
        %1304 = vmatpush.msra.mxu0 0.0
        %1305 = vmatpush.msra.mxu0 0.0
        %1306 = vmatpush.msra.mxu0 0.0
        %1307 = vmatpush.msra.mxu0 0.0
        %1308 = vmatpush.msra.mxu0 0.0
        %1309 = vmatpush.msra.mxu0 0.0
        %1310 = vmatpush.msra.mxu0 0.0
        %1311 = vmatpush.msra.mxu0 0.0
        %1312 = vmatpush.msra.mxu0 0.0
        %1313 = vmatpush.msra.mxu0 0.0
        %1314 = vmatpush.msra.mxu0 0.0
        %1315 = vmatpush.msra.mxu0 0.0
        %1316 = vmatpush.msra.mxu0 0.0
        %1317 = vmatpush.msra.mxu0 0.0
        %v1318 = vand.u32 %v373, 4294901760
        %1319 = vmatpush.msra.mxu0 %v1318
        %v1320 = vand.u32 %v372, 4294901760
        %1321 = vmatpush.msra.mxu0 %v1320
        %v1322 = vand.u32 %v1218, 4294901760
        %v1323 = vsub.f32 %v1218, %v1322
        %v1324 = vand.u32 %v1323, 4294901760
        %1325 = vmatmul.f32.gmra.mxu0 %v1324
        %v1326 = vpop.f32.mrf.mxu0
        %v1327 = vadd.f32 %v1302, %v1326
        %1328 = vdwg.mxu0
        %1329 = vmatpush.msra.mxu0 0.0
        %1330 = vmatpush.msra.mxu0 0.0
        %1331 = vmatpush.msra.mxu0 0.0
        %1332 = vmatpush.msra.mxu0 0.0
        %1333 = vmatpush.msra.mxu0 0.0
        %1334 = vmatpush.msra.mxu0 0.0
        %1335 = vmatpush.msra.mxu0 0.0
        %1336 = vmatpush.msra.mxu0 0.0
        %1337 = vmatpush.msra.mxu0 0.0
        %1338 = vmatpush.msra.mxu0 0.0
        %1339 = vmatpush.msra.mxu0 0.0
        %1340 = vmatpush.msra.mxu0 0.0
        %1341 = vmatpush.msra.mxu0 0.0
        %1342 = vmatpush.msra.mxu0 0.0
        %v1343 = vand.u32 %v373, 4294901760
        %v1344 = vsub.f32 %v373, %v1343
        %v1345 = vand.u32 %v1344, 4294901760
        %1346 = vmatpush.msra.mxu0 %v1345
        %v1347 = vand.u32 %v372, 4294901760
        %v1348 = vsub.f32 %v372, %v1347
        %v1349 = vand.u32 %v1348, 4294901760
        %1350 = vmatpush.msra.mxu0 %v1349
        %v1351 = vand.u32 %v1218, 4294901760
        %1352 = vmatmul.f32.gmra.mxu0 %v1351
        %v1353 = vpop.f32.mrf.mxu0
        %v1354 = vadd.f32 %v1327, %v1353
        %1355 = vdwg.mxu0
        %1356 = vmatpush.msra.mxu0 0.0
        %1357 = vmatpush.msra.mxu0 0.0
        %1358 = vmatpush.msra.mxu0 0.0
        %1359 = vmatpush.msra.mxu0 0.0
        %1360 = vmatpush.msra.mxu0 0.0
        %1361 = vmatpush.msra.mxu0 0.0
        %1362 = vmatpush.msra.mxu0 0.0
        %1363 = vmatpush.msra.mxu0 0.0
        %1364 = vmatpush.msra.mxu0 0.0
        %1365 = vmatpush.msra.mxu0 0.0
        %1366 = vmatpush.msra.mxu0 0.0
        %1367 = vmatpush.msra.mxu0 0.0
        %1368 = vmatpush.msra.mxu0 0.0
        %1369 = vmatpush.msra.mxu0 0.0
        %v1370 = vand.u32 %v373, 4294901760
        %1371 = vmatpush.msra.mxu0 %v1370
        %v1372 = vand.u32 %v372, 4294901760
        %1373 = vmatpush.msra.mxu0 %v1372
        %v1374 = vand.u32 %v1218, 4294901760
        %1375 = vmatmul.f32.gmra.mxu0 %v1374
        %v1376 = vpop.f32.mrf.mxu0
        %v1377 = vadd.f32 %v1354, %v1376
        %1378 = vdwg.mxu0
        %vm1379 = vcmask 64512
        %v1381 = vsel %vm1379, %v1215, 0
        %1383 = vmatpush.msra.mxu0 0.0
        %1384 = vmatpush.msra.mxu0 0.0
        %1385 = vmatpush.msra.mxu0 0.0
        %1386 = vmatpush.msra.mxu0 0.0
        %1387 = vmatpush.msra.mxu0 0.0
        %1388 = vmatpush.msra.mxu0 0.0
        %1389 = vmatpush.msra.mxu0 0.0
        %1390 = vmatpush.msra.mxu0 0.0
        %1391 = vmatpush.msra.mxu0 0.0
        %1392 = vmatpush.msra.mxu0 0.0
        %1393 = vmatpush.msra.mxu0 0.0
        %1394 = vmatpush.msra.mxu0 0.0
        %1395 = vmatpush.msra.mxu0 0.0
        %1396 = vmatpush.msra.mxu0 0.0
        %1397 = vmatpush.msra.mxu0 0.0
        %v1398 = vand.u32 %v374, 4294901760
        %1399 = vmatpush.msra.mxu0 %v1398
        %v1400 = vand.u32 %v1381, 4294901760
        %v1401 = vsub.f32 %v1381, %v1400
        %v1402 = vand.u32 %v1401, 4294901760
        %v1403 = vsub.f32 %v1401, %v1402
        %v1404 = vand.u32 %v1403, 4294901760
        %1405 = vmatmul.f32.gmra.mxu0 %v1404
        %v1406 = vpop.f32.mrf.mxu0
        %v1407 = vadd.f32 0.0, %v1406
        %1408 = vdwg.mxu0
        %1409 = vmatpush.msra.mxu0 0.0
        %1410 = vmatpush.msra.mxu0 0.0
        %1411 = vmatpush.msra.mxu0 0.0
        %1412 = vmatpush.msra.mxu0 0.0
        %1413 = vmatpush.msra.mxu0 0.0
        %1414 = vmatpush.msra.mxu0 0.0
        %1415 = vmatpush.msra.mxu0 0.0
        %1416 = vmatpush.msra.mxu0 0.0
        %1417 = vmatpush.msra.mxu0 0.0
        %1418 = vmatpush.msra.mxu0 0.0
        %1419 = vmatpush.msra.mxu0 0.0
        %1420 = vmatpush.msra.mxu0 0.0
        %1421 = vmatpush.msra.mxu0 0.0
        %1422 = vmatpush.msra.mxu0 0.0
        %1423 = vmatpush.msra.mxu0 0.0
        %v1424 = vand.u32 %v374, 4294901760
        %v1425 = vsub.f32 %v374, %v1424
        %v1426 = vand.u32 %v1425, 4294901760
        %v1427 = vsub.f32 %v1425, %v1426
        %v1428 = vand.u32 %v1427, 4294901760
        %1429 = vmatpush.msra.mxu0 %v1428
        %v1430 = vand.u32 %v1381, 4294901760
        %1431 = vmatmul.f32.gmra.mxu0 %v1430
        %v1432 = vpop.f32.mrf.mxu0
        %v1433 = vadd.f32 %v1407, %v1432
        %1434 = vdwg.mxu0
        %1435 = vmatpush.msra.mxu0 0.0
        %1436 = vmatpush.msra.mxu0 0.0
        %1437 = vmatpush.msra.mxu0 0.0
        %1438 = vmatpush.msra.mxu0 0.0
        %1439 = vmatpush.msra.mxu0 0.0
        %1440 = vmatpush.msra.mxu0 0.0
        %1441 = vmatpush.msra.mxu0 0.0
        %1442 = vmatpush.msra.mxu0 0.0
        %1443 = vmatpush.msra.mxu0 0.0
        %1444 = vmatpush.msra.mxu0 0.0
        %1445 = vmatpush.msra.mxu0 0.0
        %1446 = vmatpush.msra.mxu0 0.0
        %1447 = vmatpush.msra.mxu0 0.0
        %1448 = vmatpush.msra.mxu0 0.0
        %1449 = vmatpush.msra.mxu0 0.0
        %v1450 = vand.u32 %v374, 4294901760
        %v1451 = vsub.f32 %v374, %v1450
        %1452 = vmatpush.msra.mxu0 %v1451
        %v1453 = vand.u32 %v1381, 4294901760
        %v1454 = vsub.f32 %v1381, %v1453
        %1455 = vmatmul.f32.gmra.mxu0 %v1454
        %v1456 = vpop.f32.mrf.mxu0
        %v1457 = vadd.f32 %v1433, %v1456
        %1458 = vdwg.mxu0
        %1459 = vmatpush.msra.mxu0 0.0
        %1460 = vmatpush.msra.mxu0 0.0
        %1461 = vmatpush.msra.mxu0 0.0
        %1462 = vmatpush.msra.mxu0 0.0
        %1463 = vmatpush.msra.mxu0 0.0
        %1464 = vmatpush.msra.mxu0 0.0
        %1465 = vmatpush.msra.mxu0 0.0
        %1466 = vmatpush.msra.mxu0 0.0
        %1467 = vmatpush.msra.mxu0 0.0
        %1468 = vmatpush.msra.mxu0 0.0
        %1469 = vmatpush.msra.mxu0 0.0
        %1470 = vmatpush.msra.mxu0 0.0
        %1471 = vmatpush.msra.mxu0 0.0
        %1472 = vmatpush.msra.mxu0 0.0
        %1473 = vmatpush.msra.mxu0 0.0
        %v1474 = vand.u32 %v374, 4294901760
        %1475 = vmatpush.msra.mxu0 %v1474
        %v1476 = vand.u32 %v1381, 4294901760
        %v1477 = vsub.f32 %v1381, %v1476
        %v1478 = vand.u32 %v1477, 4294901760
        %1479 = vmatmul.f32.gmra.mxu0 %v1478
        %v1480 = vpop.f32.mrf.mxu0
        %v1481 = vadd.f32 %v1457, %v1480
        %1482 = vdwg.mxu0
        %1483 = vmatpush.msra.mxu0 0.0
        %1484 = vmatpush.msra.mxu0 0.0
        %1485 = vmatpush.msra.mxu0 0.0
        %1486 = vmatpush.msra.mxu0 0.0
        %1487 = vmatpush.msra.mxu0 0.0
        %1488 = vmatpush.msra.mxu0 0.0
        %1489 = vmatpush.msra.mxu0 0.0
        %1490 = vmatpush.msra.mxu0 0.0
        %1491 = vmatpush.msra.mxu0 0.0
        %1492 = vmatpush.msra.mxu0 0.0
        %1493 = vmatpush.msra.mxu0 0.0
        %1494 = vmatpush.msra.mxu0 0.0
        %1495 = vmatpush.msra.mxu0 0.0
        %1496 = vmatpush.msra.mxu0 0.0
        %1497 = vmatpush.msra.mxu0 0.0
        %v1498 = vand.u32 %v374, 4294901760
        %v1499 = vsub.f32 %v374, %v1498
        %v1500 = vand.u32 %v1499, 4294901760
        %1501 = vmatpush.msra.mxu0 %v1500
        %v1502 = vand.u32 %v1381, 4294901760
        %1503 = vmatmul.f32.gmra.mxu0 %v1502
        %v1504 = vpop.f32.mrf.mxu0
        %v1505 = vadd.f32 %v1481, %v1504
        %1506 = vdwg.mxu0
        %1507 = vmatpush.msra.mxu0 0.0
        %1508 = vmatpush.msra.mxu0 0.0
        %1509 = vmatpush.msra.mxu0 0.0
        %1510 = vmatpush.msra.mxu0 0.0
        %1511 = vmatpush.msra.mxu0 0.0
        %1512 = vmatpush.msra.mxu0 0.0
        %1513 = vmatpush.msra.mxu0 0.0
        %1514 = vmatpush.msra.mxu0 0.0
        %1515 = vmatpush.msra.mxu0 0.0
        %1516 = vmatpush.msra.mxu0 0.0
        %1517 = vmatpush.msra.mxu0 0.0
        %1518 = vmatpush.msra.mxu0 0.0
        %1519 = vmatpush.msra.mxu0 0.0
        %1520 = vmatpush.msra.mxu0 0.0
        %1521 = vmatpush.msra.mxu0 0.0
        %v1522 = vand.u32 %v374, 4294901760
        %1523 = vmatpush.msra.mxu0 %v1522
        %v1524 = vand.u32 %v1381, 4294901760
        %1525 = vmatmul.f32.gmra.mxu0 %v1524
        %v1526 = vpop.f32.mrf.mxu0
        %v1527 = vadd.f32 %v1505, %v1526
        %1528 = vdwg.mxu0
        %v1529 = vadd.f32 %v375, %v1377
        %v1530 = vadd.f32 %v1529, %v1527
        %v1531 = vld [vmem:[%s8] sm:$0x1]
        %v1532 = vld [vmem:[%s8 + $0x1] sm:$0x1]
        %vm1533 = vcmask 1040384
        %v1534 = vsel %vm1533, %v1530, 0.0
        %1535 = vadd.xlane.f32.xlu0 %v1534
        %v1536 = vpop.xlane.xlu0 %1535
        %v1537 = vrcp.pop 128.0
        %v1538 = vmul.f32 128.0, %v1537
        %v1539 = vsub.f32 1.0, %v1538
        %v1540 = vmul.f32 %v1537, %v1539
        %v1541 = vadd.f32 %v1537, %v1540
        %vm1542 = vweird.f32 %v1537
        %v1543 = vsel %vm1542, %v1537, %v1541
        %v1544 = vmul.f32 %v1536, %v1543
        %v1545 = vsub.f32 %v1530, %v1544
        %v1546 = vmul.f32 %v1545, %v1545
        %v1547 = vsel %vm1533, %v1546, 0.0
        %1548 = vadd.xlane.f32.xlu0 %v1547
        %v1549 = vpop.xlane.xlu0 %1548
        %v1550 = vmul.f32 %v1549, %v1543
        %v1551 = vadd.f32 %v1550, 1e-05
        %v1552 = vrsqrt.pop %v1551
        %v1553 = vmul.f32 %v1552, %v1551
        %v1554 = vmul.f32 %v1553, %v1552
        %v1555 = vmul.f32 0.5, %v1554
        %v1556 = vsub.f32 1.5, %v1555
        %v1557 = vmul.f32 %v1552, %v1556
        %vm1558 = vweird.f32 %v1551
        %vm1559 = vweird.f32 %v1552
        %vm1560 = vmor %vm1558, %vm1559
        %v1561 = vsel %vm1560, %v1552, %v1557
        %v1562 = vmul.f32 %v1545, %v1561
        %v1563 = vmul.f32 %v1562, %v1531
        %v1564 = vadd.f32 %v1563, %v1532
        %1565 = vst [vmem:[%s334] sm:$0x1] %v1564
        %s1566 = sand.u32 %s226, 1
        %s1567 = scalar_lea.sflag [#allocation3], %s1566
        %s1568 = sand.u32 %s226, 1
        %s1569 = scalar_lea.vmem [#allocation5], %s1568
        // Predicated region
        $region61: #{tpu_custom_call.1} parent=55 // pred_check
          %p1570 = pneg %p236
        $region62: #{tpu_custom_call.1} parent=55 // pred_check_branch
          %1572 = sbr.rel (%p1570) target = $region64
        $region63: #{tpu_custom_call.1} parent=55 // pred_region
          %1574 = vsyncadd %s1567, 0
          %s1575 = scalar_lea.hbm %s9, %s24
          %s1577 = sshll.u32 %s1569, 4
          %s1578 = int_to_ptr.vmem [resolvable:$true] %s1577
          %s1579 = sshll.u32 %s1575, 4
          %s1580 = int_to_ptr.hbm [resolvable:$true] %s1579
          %1582 = dma.vmem_to_hbm [thread:$0]  %s1578, 16, %s1580, %s1567
        $region64: #{tpu_custom_call.1} parent=55 // pred_fallthru
          _
      $region56: #{tpu_custom_call.1} parent=5 // pred_fallthru
        _
      %p1583 = scmp.le.s32.totalorder 2, %s19
      // Predicated region
      $region65: #{tpu_custom_call.1} parent=5 // pred_check
        %p1584 = pneg %p1583
      $region66: #{tpu_custom_call.1} parent=5 // pred_check_branch
        %1586 = sbr.rel (%p1584) target = $region68
      $region67: #{tpu_custom_call.1} parent=5 // pred_region
        %s1587 = ssub.s32 %s19, 2
        // Predicated region
        $region69: #{tpu_custom_call.1} parent=67 // pred_check
          %p1588 = pneg %p242
        $region70: #{tpu_custom_call.1} parent=67 // pred_check_branch
          %1590 = sbr.rel (%p1588) target = $region72
        $region71: #{tpu_custom_call.1} parent=67 // pred_region
          %s1591 = sand.u32 %s227, 1
          %s1592 = scalar_lea.sflag [#allocation3], %s1591
          %s1593 = sand.u32 %s227, 1
          %s1594 = scalar_lea.vmem [#allocation5], %s1593
          %1596 = dma.done %s1592, 16
        $region72: #{tpu_custom_call.1} parent=67 // pred_fallthru
          _
      $region68: #{tpu_custom_call.1} parent=5 // pred_fallthru
        _
    $region6: #{tpu_custom_call.1} parent=1 // loop_footer
      %s23 = sadd.s32 1, %s19
    $region7: #{tpu_custom_call.1} parent=1 // loop_footer_branch
      %18 = sbr.rel target = $region3
    $region8: #{tpu_custom_call.1} parent=1 // loop_exit
      _
    %1597 = vsyncpa [#allocation3], 1
    %s1598 = scalar_lea.sflag [#allocation3], 1
    %1599 = vsyncpa %s1598, 1
    %1600 = vsyncpa [#allocation4], 1
    %s1601 = scalar_lea.sflag [#allocation4], 1
    %1602 = vsyncpa %s1601, 1

</llo_original>
